<compile_context>
chip_gen: v5e
topology: v5e:2x2
jax: 0.10.0
libtpu: 0.0.40
codegen_flags: <defaults>
</compile_context>

<pallas_src>
import jax
import jax.numpy as jnp
from jax.experimental import pallas as pl
from jax.experimental.pallas import tpu as pltpu

C_IN, C_MID, C_LAT = 14, 7, 2          # channel sizes from the nn.Module
H = W = 16                             # spatial size of the demo input
S_PIX = H * W                          # 256 lanes per sample (= 2 * 128)


def autoencoder_forward(x, params, *, batch_tile=128,
                        compute_dtype=jnp.float32):
    """Autoencoder forward as one Pallas TPU kernel.

    batch_tile guidance (per generation):
      v7x (64 MiB VMEM) : <=128-192, keep ceil(N/batch_tile) >= 2 for both TCs
      v6e (128 MiB VMEM): 128-384
      v5e (128 MiB VMEM): 128-256 (slowest HBM -> tile amortization matters most)
    """
    n, c, h, w = x.shape
    assert (c, h, w) == (C_IN, H, W), (c, h, w)   # geometry below is tied to 16x16
    x = x.astype(jnp.float32)
    w1, b1, w2, b2, wt1, bt1, wt2, bt2 = params

    bt = max(1, min(batch_tile, n))
    g = -(-n // bt)                      # grid steps
    n_pad = g * bt
    if n_pad != n:                       # only touches the ragged tail tile
        x = jnp.pad(x, ((0, n_pad - n), (0, 0), (0, 0), (0, 0)))

    # Lane-dense (N, C, 256) view of the NCHW input: merging H,W is a free
    # reshape -- no extra HBM pass on either side of the pallas_call.
    xs = x.reshape(n_pad, C_IN, S_PIX)

    # Matmul-ready parameter layouts (tiny).
    b1c, b2c = b1.reshape(C_MID, 1), b2.reshape(C_LAT, 1)
    bd1c, bd2c = bt1.reshape(C_MID, 1), bt2.reshape(C_IN, 1)
    wd1, wd2 = wt1.T, wt2.T              # ConvTranspose2d weight is (C_in, C_out)

    L = bt * S_PIX                       # lanes per grid step (multiple of 128)
    cd = compute_dtype

    def kernel(x_ref, w1_ref, b1_ref, w2_ref, b2_ref,
               wd1_ref, bd1_ref, wd2_ref, bd2_ref, o_ref):
        # Repack the (bt, C_IN, 256) block into a channels-major (C_IN, bt*256)
        # slab: per-sample loads + a 256-lane-aligned concat.  Pure VMEM vreg
        # copies -- the channels-major transpose never touches HBM.
        xcm = jnp.concatenate([x_ref[b].astype(cd) for b in range(bt)], axis=1)

        def conv1x1(w_ref, b_ref, a):
            # One 2-D MXU matmul over stacked channels + one fused bias add.
            return jnp.dot(w_ref[...].astype(cd), a.astype(cd),
                           preferred_element_type=jnp.float32) + b_ref[...]

        # Per-lane coordinates inside each sample's 16x16 grid.
        lane = jax.lax.broadcasted_iota(jnp.int32, (1, L), 1)
        fj = lane & (W - 1)              # column 0..15
        fi = (lane >> 4) & (H - 1)       # row    0..15
        row_lo, row_hi = fi == 0, fi == H - 1
        col_lo, col_hi = fj == 0, fj == W - 1

        # encoder: Conv2d(14,7,1,padding=1) + ReLU.  The padded ring after the
        # ReLU is the per-channel constant relu(b1); only the 16x16 payload is
        # materialised, the ring is injected by the masked shifts below.
        a1 = jnp.maximum(conv1x1(w1_ref, b1_ref, xcm), 0.0)       # (7, L)
        m1 = jnp.maximum(b1_ref[...], 0.0)                         # (7, 1)

        # MaxPool2d(2, stride=1) on the padded 18x18 grid, evaluated at the
        # four offsets that survive the final crop.  pltpu.roll == jnp.roll:
        # roll(a, +k)[l] = a[l-k].  Lanes that would wrap across a row or a
        # sample boundary are exactly the masked ones, so no cross-sample
        # contamination is possible.
        up = jnp.where(row_lo, m1, pltpu.roll(a1, W, axis=1))      # (fi-1, fj)
        down = jnp.where(row_hi, m1, pltpu.roll(a1, L - W, axis=1))  # (fi+1, fj)
        r_up = jnp.maximum(up, a1)        # max over rows {fi-1, fi}
        r_dn = jnp.maximum(a1, down)      # max over rows {fi,   fi+1}

        def col_pair(r):
            left = jnp.where(col_lo, m1, pltpu.roll(r, 1, axis=1))       # fj-1
            right = jnp.where(col_hi, m1, pltpu.roll(r, L - 1, axis=1))  # fj+1
            return jnp.maximum(left, r), jnp.maximum(r, right)

        p00, p01 = col_pair(r_up)         # pool1[fi,   fj], pool1[fi,   fj+1]
        p10, p11 = col_pair(r_dn)         # pool1[fi+1, fj], pool1[fi+1, fj+1]

        # encoder: Conv2d(7,2,1,padding=1) + ReLU + MaxPool2d(2, stride=1).
        # Conv2's zero-padding ring never reaches outputs that survive the
        # final ConvTranspose2d(padding=1) crop (valid only for these 1x1
        # kernels / padding=1 / 16x16 shapes), so only the four interior
        # offsets are evaluated and max-reduced.
        def enc2(p):
            return jnp.maximum(conv1x1(w2_ref, b2_ref, p), 0.0)   # (2, L)

        z = jnp.maximum(jnp.maximum(enc2(p00), enc2(p01)),
                        jnp.maximum(enc2(p10), enc2(p11)))

        # decoder: ConvTranspose2d(2,7,1) + ReLU; ConvTranspose2d(7,14,1,p=1)
        # + Tanh (its crop is what restricted everything above to 16x16).
        d1 = jnp.maximum(conv1x1(wd1_ref, bd1_ref, z), 0.0)        # (7, L)
        y = jnp.tanh(conv1x1(wd2_ref, bd2_ref, d1))                # (14, L)

        # Scatter back to the (bt, C_IN, 256) output block (lane-aligned slices).
        for b in range(bt):
            o_ref[b] = y[:, b * S_PIX:(b + 1) * S_PIX]

    def full(a):
        return pl.BlockSpec(a.shape, lambda i: (0,) * a.ndim)

    macs = C_MID * C_IN + 4 * C_LAT * C_MID + C_MID * C_LAT + C_IN * C_MID
    cost = pl.CostEstimate(
        flops=2 * macs * S_PIX * n_pad,
        transcendentals=C_IN * S_PIX * n_pad,
        bytes_accessed=2 * C_IN * S_PIX * 4 * n_pad)

    out = pl.pallas_call(
        kernel,
        out_shape=jax.ShapeDtypeStruct((n_pad, C_IN, S_PIX), jnp.float32),
        grid=(g,),
        in_specs=[pl.BlockSpec((bt, C_IN, S_PIX), lambda i: (i, 0, 0)),
                  full(w1), full(b1c), full(w2), full(b2c),
                  full(wd1), full(bd1c), full(wd2), full(bd2c)],
        out_specs=pl.BlockSpec((bt, C_IN, S_PIX), lambda i: (i, 0, 0)),
        compiler_params=pltpu.CompilerParams(
            dimension_semantics=("parallel",),
            vmem_limit_bytes=48 * 1024 * 1024),
        cost_estimate=cost,
    )(xs, w1, b1c, w2, b2c, wd1, bd1c, wd2, bd2c)

    # Free reshape back to NCHW; the [:n] slice is a no-op when N % bt == 0.
    return out.reshape(n_pad, C_IN, H, W)[:n]


# ---------------------------------------------------------------------------
# Deterministic parameter init (PyTorch-style bounds 1/sqrt(fan_in); for the
# ConvTranspose layers fan_in follows weight.size(1) = out_channels).
# ---------------------------------------------------------------------------
def init_params(key):
    ks = jax.random.split(key, 8)

    def u(k, shape, fan_in):
        bound = 1.0 / (fan_in ** 0.5)
        return jax.random.uniform(k, shape, jnp.float32, -bound, bound)

    w1 = u(ks[0], (C_MID, C_IN), C_IN);    b1 = u(ks[1], (C_MID,), C_IN)
    w2 = u(ks[2], (C_LAT, C_MID), C_MID);  b2 = u(ks[3], (C_LAT,), C_MID)
    wt1 = u(ks[4], (C_LAT, C_MID), C_MID); bt1 = u(ks[5], (C_MID,), C_MID)
    wt2 = u(ks[6], (C_MID, C_IN), C_IN);   bt2 = u(ks[7], (C_IN,), C_IN)
    return (w1, b1, w2, b2, wt1, bt1, wt2, bt2)


# ---------------------------------------------------------------------------
# Independent pure-JAX reference (direct PyTorch-op translation) for checking.
# ---------------------------------------------------------------------------
def reference_forward(x, params):
    w1, b1, w2, b2, wt1, bt1, wt2, bt2 = params

    def conv1x1_p1(t, wgt, bias):                 # Conv2d(cin,cout,1,s=1,p=1)
        tp = jnp.pad(t, ((0, 0), (0, 0), (1, 1), (1, 1)))
        return jnp.einsum('oc,nchw->nohw', wgt, tp) + bias[None, :, None, None]

    def maxpool2_s1(t):                           # MaxPool2d(2, stride=1)
        return jnp.maximum(
            jnp.maximum(t[:, :, :-1, :-1], t[:, :, :-1, 1:]),
            jnp.maximum(t[:, :, 1:, :-1], t[:, :, 1:, 1:]))

    h = maxpool2_s1(jax.nn.relu(conv1x1_p1(x, w1, b1)))
    h = maxpool2_s1(jax.nn.relu(conv1x1_p1(h, w2, b2)))
    d = jax.nn.relu(jnp.einsum('co,nchw->nohw', wt1, h) + bt1[None, :, None, None])
    d = jnp.einsum('co,nchw->nohw', wt2, d) + bt2[None, :, None, None]
    return jnp.tanh(d[:, :, 1:-1, 1:-1])          # ConvTranspose2d padding=1 crop


if __name__ == "__main__":
    key = jax.random.PRNGKey(0)
    pkey, xkey = jax.random.split(key)
    params = init_params(pkey)

    # Small NCHW input consistent with the module: (batch=8, C=14, H=W=16).
    x = jax.random.normal(xkey, (8, C_IN, H, W), jnp.float32)
    ref = reference_forward(x, params)

    # f32 path (exact): batch_tile=4 -> a grid of 2 "parallel" steps.
    out = jax.block_until_ready(autoencoder_forward(x, params, batch_tile=4))
    assert out.shape == x.shape, out.shape
    err = float(jnp.max(jnp.abs(out - ref)))
    assert err < 1e-4, f"f32 max abs err {err}"

    # bf16-matmul path (f32 accumulation): the remaining ~2x MXU/VMEM lever
    # from the review; observed error is ~1e-2, checked against a loose bound.
    out_bf = jax.block_until_ready(
        autoencoder_forward(x, params, batch_tile=8,
                            compute_dtype=jnp.bfloat16))
    err_bf = float(jnp.max(jnp.abs(out_bf - ref)))
    assert err_bf < 1e-1, f"bf16 max abs err {err_bf}"

    print("KERNEL_OK")
</pallas_src>

<mosaic_0001>
module attributes {stable_mosaic.version = 11 : i64} {
  func.func @kernel(%arg0: i32, %arg1: memref<4x14x256xf32, #tpu.memory_space<vmem>>, %arg2: memref<7x14xf32, #tpu.memory_space<vmem>>, %arg3: memref<7x1xf32, #tpu.memory_space<vmem>>, %arg4: memref<2x7xf32, #tpu.memory_space<vmem>>, %arg5: memref<2x1xf32, #tpu.memory_space<vmem>>, %arg6: memref<7x2xf32, #tpu.memory_space<vmem>>, %arg7: memref<7x1xf32, #tpu.memory_space<vmem>>, %arg8: memref<14x7xf32, #tpu.memory_space<vmem>>, %arg9: memref<14x1xf32, #tpu.memory_space<vmem>>, %arg10: memref<4x14x256xf32, #tpu.memory_space<vmem>>) attributes {dimension_semantics = [#tpu.dimension_semantics<parallel>], iteration_bounds = array<i64: 2>, scalar_prefetch = 0 : i64, scratch_operands = 0 : i64, tpu.core_type = #tpu.core_type<tc>, window_params = [{transform_indices = @transform_0, window_bounds = array<i64: 4, 14, 256>}, {pipeline_mode = #tpu.pipeline_mode<synchronous>, transform_indices = @transform_1, window_bounds = array<i64: 7, 14>}, {pipeline_mode = #tpu.pipeline_mode<synchronous>, transform_indices = @transform_2, window_bounds = array<i64: 7, 1>}, {pipeline_mode = #tpu.pipeline_mode<synchronous>, transform_indices = @transform_3, window_bounds = array<i64: 2, 7>}, {pipeline_mode = #tpu.pipeline_mode<synchronous>, transform_indices = @transform_4, window_bounds = array<i64: 2, 1>}, {pipeline_mode = #tpu.pipeline_mode<synchronous>, transform_indices = @transform_5, window_bounds = array<i64: 7, 2>}, {pipeline_mode = #tpu.pipeline_mode<synchronous>, transform_indices = @transform_6, window_bounds = array<i64: 7, 1>}, {pipeline_mode = #tpu.pipeline_mode<synchronous>, transform_indices = @transform_7, window_bounds = array<i64: 14, 7>}, {pipeline_mode = #tpu.pipeline_mode<synchronous>, transform_indices = @transform_8, window_bounds = array<i64: 14, 1>}, {transform_indices = @transform_9, window_bounds = array<i64: 4, 14, 256>}]} {
    %c0 = arith.constant 0 : index
    %c0_0 = arith.constant 0 : index
    %c0_1 = arith.constant 0 : index
    %0 = vector.load %arg1[%c0, %c0_0, %c0_1] : memref<4x14x256xf32, #tpu.memory_space<vmem>>, vector<1x14x256xf32>
    %1 = vector.shape_cast %0 : vector<1x14x256xf32> to vector<14x256xf32>
    %c1 = arith.constant 1 : index
    %c0_2 = arith.constant 0 : index
    %c0_3 = arith.constant 0 : index
    %2 = vector.load %arg1[%c1, %c0_2, %c0_3] : memref<4x14x256xf32, #tpu.memory_space<vmem>>, vector<1x14x256xf32>
    %3 = vector.shape_cast %2 : vector<1x14x256xf32> to vector<14x256xf32>
    %c2 = arith.constant 2 : index
    %c0_4 = arith.constant 0 : index
    %c0_5 = arith.constant 0 : index
    %4 = vector.load %arg1[%c2, %c0_4, %c0_5] : memref<4x14x256xf32, #tpu.memory_space<vmem>>, vector<1x14x256xf32>
    %5 = vector.shape_cast %4 : vector<1x14x256xf32> to vector<14x256xf32>
    %c3 = arith.constant 3 : index
    %c0_6 = arith.constant 0 : index
    %c0_7 = arith.constant 0 : index
    %6 = vector.load %arg1[%c3, %c0_6, %c0_7] : memref<4x14x256xf32, #tpu.memory_space<vmem>>, vector<1x14x256xf32>
    %7 = vector.shape_cast %6 : vector<1x14x256xf32> to vector<14x256xf32>
    %8 = tpu.concatenate %1, %3, %5, %7 in 1 : vector<14x256xf32>, vector<14x256xf32>, vector<14x256xf32>, vector<14x256xf32> -> vector<14x1024xf32>
    %9 = tpu.iota {dimensions = array<i32: 1>} : vector<1x1024xi32>
    %c15_i32 = arith.constant 15 : i32
    %10 = vector.broadcast %c15_i32 : i32 to vector<1x1024xi32>
    %11 = arith.andi %9, %10 : vector<1x1024xi32>
    %c4_i32 = arith.constant 4 : i32
    %12 = vector.broadcast %c4_i32 : i32 to vector<1x1024xi32>
    %13 = arith.shrsi %9, %12 : vector<1x1024xi32>
    %c15_i32_8 = arith.constant 15 : i32
    %14 = vector.broadcast %c15_i32_8 : i32 to vector<1x1024xi32>
    %15 = arith.andi %13, %14 : vector<1x1024xi32>
    %c0_i32 = arith.constant 0 : i32
    %16 = vector.broadcast %c0_i32 : i32 to vector<1x1024xi32>
    %17 = arith.cmpi eq, %15, %16 : vector<1x1024xi32>
    %c15_i32_9 = arith.constant 15 : i32
    %18 = vector.broadcast %c15_i32_9 : i32 to vector<1x1024xi32>
    %19 = arith.cmpi eq, %15, %18 : vector<1x1024xi32>
    %c0_i32_10 = arith.constant 0 : i32
    %20 = vector.broadcast %c0_i32_10 : i32 to vector<1x1024xi32>
    %21 = arith.cmpi eq, %11, %20 : vector<1x1024xi32>
    %c15_i32_11 = arith.constant 15 : i32
    %22 = vector.broadcast %c15_i32_11 : i32 to vector<1x1024xi32>
    %23 = arith.cmpi eq, %11, %22 : vector<1x1024xi32>
    %c0_12 = arith.constant 0 : index
    %c0_13 = arith.constant 0 : index
    %24 = vector.load %arg2[%c0_12, %c0_13] : memref<7x14xf32, #tpu.memory_space<vmem>>, vector<7x14xf32>
    %cst = arith.constant dense<0.000000e+00> : vector<7x1024xf32>
    %25 = tpu.matmul %24, %8, %cst {dimension_numbers = #tpu.dot_dimension_numbers<[1], [0], [0], [1], [0, 0, 1, 1], [], []>} : vector<7x14xf32>, vector<14x1024xf32>, vector<7x1024xf32> -> vector<7x1024xf32>
    %c0_14 = arith.constant 0 : index
    %c0_15 = arith.constant 0 : index
    %26 = vector.load %arg3[%c0_14, %c0_15] : memref<7x1xf32, #tpu.memory_space<vmem>>, vector<7x1xf32>
    %27 = vector.broadcast %26 : vector<7x1xf32> to vector<7x1024xf32>
    %28 = arith.addf %25, %27 : vector<7x1024xf32>
    %cst_16 = arith.constant 0.000000e+00 : f32
    %29 = vector.broadcast %cst_16 : f32 to vector<7x1024xf32>
    %30 = arith.maximumf %28, %29 : vector<7x1024xf32>
    %c0_17 = arith.constant 0 : index
    %c0_18 = arith.constant 0 : index
    %31 = vector.load %arg3[%c0_17, %c0_18] : memref<7x1xf32, #tpu.memory_space<vmem>>, vector<7x1xf32>
    %cst_19 = arith.constant 0.000000e+00 : f32
    %32 = vector.broadcast %cst_19 : f32 to vector<7x1xf32>
    %33 = arith.maximumf %31, %32 : vector<7x1xf32>
    %c16_i32 = arith.constant 16 : i32
    %34 = tpu.dynamic_rotate %30 by %c16_i32 dim 1 : vector<7x1024xf32>, i32 -> vector<7x1024xf32>
    %35 = vector.shape_cast %17 : vector<1x1024xi1> to vector<1x1024xi1>
    %36 = vector.broadcast %35 : vector<1x1024xi1> to vector<7x1024xi1>
    %37 = vector.shape_cast %33 : vector<7x1xf32> to vector<7x1xf32>
    %38 = vector.broadcast %37 : vector<7x1xf32> to vector<7x1024xf32>
    %39 = arith.select %36, %38, %34 : vector<7x1024xi1>, vector<7x1024xf32>
    %c1008_i32 = arith.constant 1008 : i32
    %40 = tpu.dynamic_rotate %30 by %c1008_i32 dim 1 : vector<7x1024xf32>, i32 -> vector<7x1024xf32>
    %41 = vector.shape_cast %19 : vector<1x1024xi1> to vector<1x1024xi1>
    %42 = vector.broadcast %41 : vector<1x1024xi1> to vector<7x1024xi1>
    %43 = vector.shape_cast %33 : vector<7x1xf32> to vector<7x1xf32>
    %44 = vector.broadcast %43 : vector<7x1xf32> to vector<7x1024xf32>
    %45 = arith.select %42, %44, %40 : vector<7x1024xi1>, vector<7x1024xf32>
    %46 = arith.maximumf %39, %30 : vector<7x1024xf32>
    %47 = arith.maximumf %30, %45 : vector<7x1024xf32>
    %c1_i32 = arith.constant 1 : i32
    %48 = tpu.dynamic_rotate %46 by %c1_i32 dim 1 : vector<7x1024xf32>, i32 -> vector<7x1024xf32>
    %49 = vector.shape_cast %21 : vector<1x1024xi1> to vector<1x1024xi1>
    %50 = vector.broadcast %49 : vector<1x1024xi1> to vector<7x1024xi1>
    %51 = vector.shape_cast %33 : vector<7x1xf32> to vector<7x1xf32>
    %52 = vector.broadcast %51 : vector<7x1xf32> to vector<7x1024xf32>
    %53 = arith.select %50, %52, %48 : vector<7x1024xi1>, vector<7x1024xf32>
    %c1023_i32 = arith.constant 1023 : i32
    %54 = tpu.dynamic_rotate %46 by %c1023_i32 dim 1 : vector<7x1024xf32>, i32 -> vector<7x1024xf32>
    %55 = vector.shape_cast %23 : vector<1x1024xi1> to vector<1x1024xi1>
    %56 = vector.broadcast %55 : vector<1x1024xi1> to vector<7x1024xi1>
    %57 = vector.shape_cast %33 : vector<7x1xf32> to vector<7x1xf32>
    %58 = vector.broadcast %57 : vector<7x1xf32> to vector<7x1024xf32>
    %59 = arith.select %56, %58, %54 : vector<7x1024xi1>, vector<7x1024xf32>
    %60 = arith.maximumf %53, %46 : vector<7x1024xf32>
    %61 = arith.maximumf %46, %59 : vector<7x1024xf32>
    %c1_i32_20 = arith.constant 1 : i32
    %62 = tpu.dynamic_rotate %47 by %c1_i32_20 dim 1 : vector<7x1024xf32>, i32 -> vector<7x1024xf32>
    %63 = vector.shape_cast %21 : vector<1x1024xi1> to vector<1x1024xi1>
    %64 = vector.broadcast %63 : vector<1x1024xi1> to vector<7x1024xi1>
    %65 = vector.shape_cast %33 : vector<7x1xf32> to vector<7x1xf32>
    %66 = vector.broadcast %65 : vector<7x1xf32> to vector<7x1024xf32>
    %67 = arith.select %64, %66, %62 : vector<7x1024xi1>, vector<7x1024xf32>
    %c1023_i32_21 = arith.constant 1023 : i32
    %68 = tpu.dynamic_rotate %47 by %c1023_i32_21 dim 1 : vector<7x1024xf32>, i32 -> vector<7x1024xf32>
    %69 = vector.shape_cast %23 : vector<1x1024xi1> to vector<1x1024xi1>
    %70 = vector.broadcast %69 : vector<1x1024xi1> to vector<7x1024xi1>
    %71 = vector.shape_cast %33 : vector<7x1xf32> to vector<7x1xf32>
    %72 = vector.broadcast %71 : vector<7x1xf32> to vector<7x1024xf32>
    %73 = arith.select %70, %72, %68 : vector<7x1024xi1>, vector<7x1024xf32>
    %74 = arith.maximumf %67, %47 : vector<7x1024xf32>
    %75 = arith.maximumf %47, %73 : vector<7x1024xf32>
    %c0_22 = arith.constant 0 : index
    %c0_23 = arith.constant 0 : index
    %76 = vector.load %arg4[%c0_22, %c0_23] : memref<2x7xf32, #tpu.memory_space<vmem>>, vector<2x7xf32>
    %cst_24 = arith.constant dense<0.000000e+00> : vector<2x1024xf32>
    %77 = tpu.matmul %76, %60, %cst_24 {dimension_numbers = #tpu.dot_dimension_numbers<[1], [0], [0], [1], [0, 0, 1, 1], [], []>} : vector<2x7xf32>, vector<7x1024xf32>, vector<2x1024xf32> -> vector<2x1024xf32>
    %c0_25 = arith.constant 0 : index
    %c0_26 = arith.constant 0 : index
    %78 = vector.load %arg5[%c0_25, %c0_26] : memref<2x1xf32, #tpu.memory_space<vmem>>, vector<2x1xf32>
    %79 = vector.broadcast %78 : vector<2x1xf32> to vector<2x1024xf32>
    %80 = arith.addf %77, %79 : vector<2x1024xf32>
    %cst_27 = arith.constant 0.000000e+00 : f32
    %81 = vector.broadcast %cst_27 : f32 to vector<2x1024xf32>
    %82 = arith.maximumf %80, %81 : vector<2x1024xf32>
    %c0_28 = arith.constant 0 : index
    %c0_29 = arith.constant 0 : index
    %83 = vector.load %arg4[%c0_28, %c0_29] : memref<2x7xf32, #tpu.memory_space<vmem>>, vector<2x7xf32>
    %cst_30 = arith.constant dense<0.000000e+00> : vector<2x1024xf32>
    %84 = tpu.matmul %83, %61, %cst_30 {dimension_numbers = #tpu.dot_dimension_numbers<[1], [0], [0], [1], [0, 0, 1, 1], [], []>} : vector<2x7xf32>, vector<7x1024xf32>, vector<2x1024xf32> -> vector<2x1024xf32>
    %c0_31 = arith.constant 0 : index
    %c0_32 = arith.constant 0 : index
    %85 = vector.load %arg5[%c0_31, %c0_32] : memref<2x1xf32, #tpu.memory_space<vmem>>, vector<2x1xf32>
    %86 = vector.broadcast %85 : vector<2x1xf32> to vector<2x1024xf32>
    %87 = arith.addf %84, %86 : vector<2x1024xf32>
    %cst_33 = arith.constant 0.000000e+00 : f32
    %88 = vector.broadcast %cst_33 : f32 to vector<2x1024xf32>
    %89 = arith.maximumf %87, %88 : vector<2x1024xf32>
    %90 = arith.maximumf %82, %89 : vector<2x1024xf32>
    %c0_34 = arith.constant 0 : index
    %c0_35 = arith.constant 0 : index
    %91 = vector.load %arg4[%c0_34, %c0_35] : memref<2x7xf32, #tpu.memory_space<vmem>>, vector<2x7xf32>
    %cst_36 = arith.constant dense<0.000000e+00> : vector<2x1024xf32>
    %92 = tpu.matmul %91, %74, %cst_36 {dimension_numbers = #tpu.dot_dimension_numbers<[1], [0], [0], [1], [0, 0, 1, 1], [], []>} : vector<2x7xf32>, vector<7x1024xf32>, vector<2x1024xf32> -> vector<2x1024xf32>
    %c0_37 = arith.constant 0 : index
    %c0_38 = arith.constant 0 : index
    %93 = vector.load %arg5[%c0_37, %c0_38] : memref<2x1xf32, #tpu.memory_space<vmem>>, vector<2x1xf32>
    %94 = vector.broadcast %93 : vector<2x1xf32> to vector<2x1024xf32>
    %95 = arith.addf %92, %94 : vector<2x1024xf32>
    %cst_39 = arith.constant 0.000000e+00 : f32
    %96 = vector.broadcast %cst_39 : f32 to vector<2x1024xf32>
    %97 = arith.maximumf %95, %96 : vector<2x1024xf32>
    %c0_40 = arith.constant 0 : index
    %c0_41 = arith.constant 0 : index
    %98 = vector.load %arg4[%c0_40, %c0_41] : memref<2x7xf32, #tpu.memory_space<vmem>>, vector<2x7xf32>
    %cst_42 = arith.constant dense<0.000000e+00> : vector<2x1024xf32>
    %99 = tpu.matmul %98, %75, %cst_42 {dimension_numbers = #tpu.dot_dimension_numbers<[1], [0], [0], [1], [0, 0, 1, 1], [], []>} : vector<2x7xf32>, vector<7x1024xf32>, vector<2x1024xf32> -> vector<2x1024xf32>
    %c0_43 = arith.constant 0 : index
    %c0_44 = arith.constant 0 : index
    %100 = vector.load %arg5[%c0_43, %c0_44] : memref<2x1xf32, #tpu.memory_space<vmem>>, vector<2x1xf32>
    %101 = vector.broadcast %100 : vector<2x1xf32> to vector<2x1024xf32>
    %102 = arith.addf %99, %101 : vector<2x1024xf32>
    %cst_45 = arith.constant 0.000000e+00 : f32
    %103 = vector.broadcast %cst_45 : f32 to vector<2x1024xf32>
    %104 = arith.maximumf %102, %103 : vector<2x1024xf32>
    %105 = arith.maximumf %97, %104 : vector<2x1024xf32>
    %106 = arith.maximumf %90, %105 : vector<2x1024xf32>
    %c0_46 = arith.constant 0 : index
    %c0_47 = arith.constant 0 : index
    %107 = vector.load %arg6[%c0_46, %c0_47] : memref<7x2xf32, #tpu.memory_space<vmem>>, vector<7x2xf32>
    %cst_48 = arith.constant dense<0.000000e+00> : vector<7x1024xf32>
    %108 = tpu.matmul %107, %106, %cst_48 {dimension_numbers = #tpu.dot_dimension_numbers<[1], [0], [0], [1], [0, 0, 1, 1], [], []>} : vector<7x2xf32>, vector<2x1024xf32>, vector<7x1024xf32> -> vector<7x1024xf32>
    %c0_49 = arith.constant 0 : index
    %c0_50 = arith.constant 0 : index
    %109 = vector.load %arg7[%c0_49, %c0_50] : memref<7x1xf32, #tpu.memory_space<vmem>>, vector<7x1xf32>
    %110 = vector.broadcast %109 : vector<7x1xf32> to vector<7x1024xf32>
    %111 = arith.addf %108, %110 : vector<7x1024xf32>
    %cst_51 = arith.constant 0.000000e+00 : f32
    %112 = vector.broadcast %cst_51 : f32 to vector<7x1024xf32>
    %113 = arith.maximumf %111, %112 : vector<7x1024xf32>
    %c0_52 = arith.constant 0 : index
    %c0_53 = arith.constant 0 : index
    %114 = vector.load %arg8[%c0_52, %c0_53] : memref<14x7xf32, #tpu.memory_space<vmem>>, vector<14x7xf32>
    %cst_54 = arith.constant dense<0.000000e+00> : vector<14x1024xf32>
    %115 = tpu.matmul %114, %113, %cst_54 {dimension_numbers = #tpu.dot_dimension_numbers<[1], [0], [0], [1], [0, 0, 1, 1], [], []>} : vector<14x7xf32>, vector<7x1024xf32>, vector<14x1024xf32> -> vector<14x1024xf32>
    %c0_55 = arith.constant 0 : index
    %c0_56 = arith.constant 0 : index
    %116 = vector.load %arg9[%c0_55, %c0_56] : memref<14x1xf32, #tpu.memory_space<vmem>>, vector<14x1xf32>
    %117 = vector.broadcast %116 : vector<14x1xf32> to vector<14x1024xf32>
    %118 = arith.addf %115, %117 : vector<14x1024xf32>
    %119 = math.tanh %118 : vector<14x1024xf32>
    %120 = vector.extract_strided_slice %119 {offsets = [0, 0], sizes = [14, 256], strides = [1, 1]} : vector<14x1024xf32> to vector<14x256xf32>
    %c0_57 = arith.constant 0 : index
    %c0_58 = arith.constant 0 : index
    %c0_59 = arith.constant 0 : index
    %121 = vector.load %arg10[%c0_57, %c0_58, %c0_59] : memref<4x14x256xf32, #tpu.memory_space<vmem>>, vector<1x14x256xf32>
    %122 = vector.shape_cast %121 : vector<1x14x256xf32> to vector<14x256xf32>
    %123 = vector.shape_cast %120 : vector<14x256xf32> to vector<1x14x256xf32>
    tpu.vector_store %arg10[%c0_57, %c0_58, %c0_59], %123 {strides = array<i32>} : memref<4x14x256xf32, #tpu.memory_space<vmem>>, vector<1x14x256xf32>,
    %124 = vector.extract_strided_slice %119 {offsets = [0, 256], sizes = [14, 256], strides = [1, 1]} : vector<14x1024xf32> to vector<14x256xf32>
    %c1_60 = arith.constant 1 : index
    %c0_61 = arith.constant 0 : index
    %c0_62 = arith.constant 0 : index
    %125 = vector.load %arg10[%c1_60, %c0_61, %c0_62] : memref<4x14x256xf32, #tpu.memory_space<vmem>>, vector<1x14x256xf32>
    %126 = vector.shape_cast %125 : vector<1x14x256xf32> to vector<14x256xf32>
    %127 = vector.shape_cast %124 : vector<14x256xf32> to vector<1x14x256xf32>
    tpu.vector_store %arg10[%c1_60, %c0_61, %c0_62], %127 {strides = array<i32>} : memref<4x14x256xf32, #tpu.memory_space<vmem>>, vector<1x14x256xf32>,
    %128 = vector.extract_strided_slice %119 {offsets = [0, 512], sizes = [14, 256], strides = [1, 1]} : vector<14x1024xf32> to vector<14x256xf32>
    %c2_63 = arith.constant 2 : index
    %c0_64 = arith.constant 0 : index
    %c0_65 = arith.constant 0 : index
    %129 = vector.load %arg10[%c2_63, %c0_64, %c0_65] : memref<4x14x256xf32, #tpu.memory_space<vmem>>, vector<1x14x256xf32>
    %130 = vector.shape_cast %129 : vector<1x14x256xf32> to vector<14x256xf32>
    %131 = vector.shape_cast %128 : vector<14x256xf32> to vector<1x14x256xf32>
    tpu.vector_store %arg10[%c2_63, %c0_64, %c0_65], %131 {strides = array<i32>} : memref<4x14x256xf32, #tpu.memory_space<vmem>>, vector<1x14x256xf32>,
    %132 = vector.extract_strided_slice %119 {offsets = [0, 768], sizes = [14, 256], strides = [1, 1]} : vector<14x1024xf32> to vector<14x256xf32>
    %c3_66 = arith.constant 3 : index
    %c0_67 = arith.constant 0 : index
    %c0_68 = arith.constant 0 : index
    %133 = vector.load %arg10[%c3_66, %c0_67, %c0_68] : memref<4x14x256xf32, #tpu.memory_space<vmem>>, vector<1x14x256xf32>
    %134 = vector.shape_cast %133 : vector<1x14x256xf32> to vector<14x256xf32>
    %135 = vector.shape_cast %132 : vector<14x256xf32> to vector<1x14x256xf32>
    tpu.vector_store %arg10[%c3_66, %c0_67, %c0_68], %135 {strides = array<i32>} : memref<4x14x256xf32, #tpu.memory_space<vmem>>, vector<1x14x256xf32>,
    return
  }
  func.func @transform_0(%arg0: i32) -> (i32, i32, i32) {
    %c0_i32 = arith.constant 0 : i32
    %c0_i32_0 = arith.constant 0 : i32
    %c0_i32_1 = arith.constant 0 : i32
    return %arg0, %c0_i32, %c0_i32_0 : i32, i32, i32
  }
  func.func @transform_1(%arg0: i32) -> (i32, i32) {
    %c0_i32 = arith.constant 0 : i32
    %c0_i32_0 = arith.constant 0 : i32
    %c0_i32_1 = arith.constant 0 : i32
    return %c0_i32, %c0_i32_0 : i32, i32
  }
  func.func @transform_2(%arg0: i32) -> (i32, i32) {
    %c0_i32 = arith.constant 0 : i32
    %c0_i32_0 = arith.constant 0 : i32
    %c0_i32_1 = arith.constant 0 : i32
    return %c0_i32, %c0_i32_0 : i32, i32
  }
  func.func @transform_3(%arg0: i32) -> (i32, i32) {
    %c0_i32 = arith.constant 0 : i32
    %c0_i32_0 = arith.constant 0 : i32
    %c0_i32_1 = arith.constant 0 : i32
    return %c0_i32, %c0_i32_0 : i32, i32
  }
  func.func @transform_4(%arg0: i32) -> (i32, i32) {
    %c0_i32 = arith.constant 0 : i32
    %c0_i32_0 = arith.constant 0 : i32
    %c0_i32_1 = arith.constant 0 : i32
    return %c0_i32, %c0_i32_0 : i32, i32
  }
  func.func @transform_5(%arg0: i32) -> (i32, i32) {
    %c0_i32 = arith.constant 0 : i32
    %c0_i32_0 = arith.constant 0 : i32
    %c0_i32_1 = arith.constant 0 : i32
    return %c0_i32, %c0_i32_0 : i32, i32
  }
  func.func @transform_6(%arg0: i32) -> (i32, i32) {
    %c0_i32 = arith.constant 0 : i32
    %c0_i32_0 = arith.constant 0 : i32
    %c0_i32_1 = arith.constant 0 : i32
    return %c0_i32, %c0_i32_0 : i32, i32
  }
  func.func @transform_7(%arg0: i32) -> (i32, i32) {
    %c0_i32 = arith.constant 0 : i32
    %c0_i32_0 = arith.constant 0 : i32
    %c0_i32_1 = arith.constant 0 : i32
    return %c0_i32, %c0_i32_0 : i32, i32
  }
  func.func @transform_8(%arg0: i32) -> (i32, i32) {
    %c0_i32 = arith.constant 0 : i32
    %c0_i32_0 = arith.constant 0 : i32
    %c0_i32_1 = arith.constant 0 : i32
    return %c0_i32, %c0_i32_0 : i32, i32
  }
  func.func @transform_9(%arg0: i32) -> (i32, i32, i32) {
    %c0_i32 = arith.constant 0 : i32
    %c0_i32_0 = arith.constant 0 : i32
    %c0_i32_1 = arith.constant 0 : i32
    return %arg0, %c0_i32, %c0_i32_0 : i32, i32, i32
  }
}

</mosaic_0001>

<llo_original>
// kernel: tpu_custom_call.1
$region0: #{tpu_custom_call.1}
  #allocation0 [shape = 'u32[]', space=smem, size = 0x4, offset = 0x4, fixed_abs, tag = 'smem constant byte address 0x4 - core index']
  #allocation1 [shape = 'u32[72,128]{1,0:T(1,128)}', space=vmem, size = 0x9000, scoped, tag = 'internal scratch']
  %s0 = inlined_call_operand.vmem [shape: f32[8,14,256], index: 0, kind: input, shape index: {}]
  %s1 = inlined_call_operand.vmem [shape: f32[7,14], index: 1, kind: input, shape index: {}]
  %s2 = inlined_call_operand.vmem [shape: f32[7,1], index: 2, kind: input, shape index: {}]
  %s3 = inlined_call_operand.vmem [shape: f32[2,7], index: 3, kind: input, shape index: {}]
  %s4 = inlined_call_operand.vmem [shape: f32[2,1], index: 4, kind: input, shape index: {}]
  %s5 = inlined_call_operand.vmem [shape: f32[7,2], index: 5, kind: input, shape index: {}]
  %s6 = inlined_call_operand.vmem [shape: f32[7,1], index: 6, kind: input, shape index: {}]
  %s7 = inlined_call_operand.vmem [shape: f32[14,7], index: 7, kind: input, shape index: {}]
  %s8 = inlined_call_operand.vmem [shape: f32[14,1], index: 8, kind: input, shape index: {}]
  %s9 = inlined_call_operand.vmem [shape: f32[8,14,256], index: 9, kind: output, shape index: {}]
  %s10 = sld [smem:[#allocation0]]
  $region69: #{tpu_custom_call.1} parent=0
    _
  %s12 = ssub.s32 1, %s10
  %s13 = scalar_select 0, %s12, %s10
  loop: start=0, step=1, limit=4
  $region2: #{tpu_custom_call.1} parent=0 // loop_pre_header
    _
  $region3: #{tpu_custom_call.1} parent=0 // loop_header
    %s15 = sphi 0, %s19
    %p16 = scmp.ge.s32.totalorder %s15, 4
    %s25 = sphi 0, %s27
    %s28 = sphi 0, %s25
    %s29 = sphi 0, %s28
    %s45 = sphi 0, %s29
    %s49 = sphi 0, %s49
    %s51 = sphi 0, %s49
    %s52 = sphi 0, %s51
    %s66 = sphi 0, %s52
    %s70 = sphi 0, %s70
    %s72 = sphi 0, %s70
    %s73 = sphi 0, %s72
    %s87 = sphi 0, %s73
    %s91 = sphi 0, %s91
    %s93 = sphi 0, %s91
    %s94 = sphi 0, %s93
    %s108 = sphi 0, %s94
    %s112 = sphi 0, %s112
    %s114 = sphi 0, %s112
    %s115 = sphi 0, %s114
    %s129 = sphi 0, %s115
    %s133 = sphi 0, %s133
    %s135 = sphi 0, %s133
    %s136 = sphi 0, %s135
    %s150 = sphi 0, %s136
    %s154 = sphi 0, %s154
    %s156 = sphi 0, %s154
    %s157 = sphi 0, %s156
    %s171 = sphi 0, %s157
    %s175 = sphi 0, %s175
    %s177 = sphi 0, %s175
    %s178 = sphi 0, %s177
    %s192 = sphi 0, %s178
    %s196 = sphi 0, %s196
    %s198 = sphi 0, %s196
    %s199 = sphi 0, %s198
    %s213 = sphi 0, %s199
    %s219 = sphi 0, %s221
    %s222 = sphi 0, %s219
    %s223 = sphi 0, %s222
    %s239 = sphi 0, %s223
  $region4: #{tpu_custom_call.1} parent=0 // loop_header_branch
    %18 = sbr.rel (%p16) target = $region8
  $region5: #{tpu_custom_call.1} parent=0 // loop_body
    %s20 = ssub.s32 %s15, 1
    %s21 = ssub.s32 %s15, 2
    %s22 = sadd.s32 %s15, 1
    %s23 = ssub.s32 %s15, %s22
    %p24 = scmp.eq.s32.totalorder %s23, 0
    %s26 = sadd.s32 %s25, 1
    %s27 = scalar_select %p24, %s25, %s26
    %p30 = pneg %p24
    %p31 = scmp.eq.s32.totalorder %s15, 1
    %p32 = por %p30, %p31
    %p33 = scmp.ne.s32.totalorder %s25, %s28
    %p34 = scmp.eq.s32.totalorder %s15, 0
    %p35 = por %p33, %p34
    %p36 = scmp.ne.s32.totalorder %s25, %s28
    %p37 = scmp.eq.s32.totalorder %s20, 1
    %p38 = por %p36, %p37
    %p39 = scmp.ne.s32.totalorder %s28, %s29
    %p40 = scmp.eq.s32.totalorder %s20, 0
    %p41 = por %p39, %p40
    %p42 = scmp.ne.s32.totalorder %s28, %s29
    %p43 = scmp.eq.s32.totalorder %s21, 1
    %p44 = por %p42, %p43
    %p46 = scmp.ne.s32.totalorder %s29, %s45
    %p47 = scmp.eq.s32.totalorder %s21, 0
    %p48 = por %p46, %p47
    %s50 = sadd.s32 %s49, 1
    %p53 = scmp.eq.s32.totalorder %s15, 1
    %p54 = scmp.ne.s32.totalorder %s49, %s51
    %p55 = scmp.eq.s32.totalorder %s15, 0
    %p56 = por %p54, %p55
    %p57 = scmp.ne.s32.totalorder %s49, %s51
    %p58 = scmp.eq.s32.totalorder %s20, 1
    %p59 = por %p57, %p58
    %p60 = scmp.ne.s32.totalorder %s51, %s52
    %p61 = scmp.eq.s32.totalorder %s20, 0
    %p62 = por %p60, %p61
    %p63 = scmp.ne.s32.totalorder %s51, %s52
    %p64 = scmp.eq.s32.totalorder %s21, 1
    %p65 = por %p63, %p64
    %p67 = scmp.ne.s32.totalorder %s52, %s66
    %p68 = scmp.eq.s32.totalorder %s21, 0
    %p69 = por %p67, %p68
    %s71 = sadd.s32 %s70, 1
    %p74 = scmp.eq.s32.totalorder %s15, 1
    %p75 = scmp.ne.s32.totalorder %s70, %s72
    %p76 = scmp.eq.s32.totalorder %s15, 0
    %p77 = por %p75, %p76
    %p78 = scmp.ne.s32.totalorder %s70, %s72
    %p79 = scmp.eq.s32.totalorder %s20, 1
    %p80 = por %p78, %p79
    %p81 = scmp.ne.s32.totalorder %s72, %s73
    %p82 = scmp.eq.s32.totalorder %s20, 0
    %p83 = por %p81, %p82
    %p84 = scmp.ne.s32.totalorder %s72, %s73
    %p85 = scmp.eq.s32.totalorder %s21, 1
    %p86 = por %p84, %p85
    %p88 = scmp.ne.s32.totalorder %s73, %s87
    %p89 = scmp.eq.s32.totalorder %s21, 0
    %p90 = por %p88, %p89
    %s92 = sadd.s32 %s91, 1
    %p95 = scmp.eq.s32.totalorder %s15, 1
    %p96 = scmp.ne.s32.totalorder %s91, %s93
    %p97 = scmp.eq.s32.totalorder %s15, 0
    %p98 = por %p96, %p97
    %p99 = scmp.ne.s32.totalorder %s91, %s93
    %p100 = scmp.eq.s32.totalorder %s20, 1
    %p101 = por %p99, %p100
    %p102 = scmp.ne.s32.totalorder %s93, %s94
    %p103 = scmp.eq.s32.totalorder %s20, 0
    %p104 = por %p102, %p103
    %p105 = scmp.ne.s32.totalorder %s93, %s94
    %p106 = scmp.eq.s32.totalorder %s21, 1
    %p107 = por %p105, %p106
    %p109 = scmp.ne.s32.totalorder %s94, %s108
    %p110 = scmp.eq.s32.totalorder %s21, 0
    %p111 = por %p109, %p110
    %s113 = sadd.s32 %s112, 1
    %p116 = scmp.eq.s32.totalorder %s15, 1
    %p117 = scmp.ne.s32.totalorder %s112, %s114
    %p118 = scmp.eq.s32.totalorder %s15, 0
    %p119 = por %p117, %p118
    %p120 = scmp.ne.s32.totalorder %s112, %s114
    %p121 = scmp.eq.s32.totalorder %s20, 1
    %p122 = por %p120, %p121
    %p123 = scmp.ne.s32.totalorder %s114, %s115
    %p124 = scmp.eq.s32.totalorder %s20, 0
    %p125 = por %p123, %p124
    %p126 = scmp.ne.s32.totalorder %s114, %s115
    %p127 = scmp.eq.s32.totalorder %s21, 1
    %p128 = por %p126, %p127
    %p130 = scmp.ne.s32.totalorder %s115, %s129
    %p131 = scmp.eq.s32.totalorder %s21, 0
    %p132 = por %p130, %p131
    %s134 = sadd.s32 %s133, 1
    %p137 = scmp.eq.s32.totalorder %s15, 1
    %p138 = scmp.ne.s32.totalorder %s133, %s135
    %p139 = scmp.eq.s32.totalorder %s15, 0
    %p140 = por %p138, %p139
    %p141 = scmp.ne.s32.totalorder %s133, %s135
    %p142 = scmp.eq.s32.totalorder %s20, 1
    %p143 = por %p141, %p142
    %p144 = scmp.ne.s32.totalorder %s135, %s136
    %p145 = scmp.eq.s32.totalorder %s20, 0
    %p146 = por %p144, %p145
    %p147 = scmp.ne.s32.totalorder %s135, %s136
    %p148 = scmp.eq.s32.totalorder %s21, 1
    %p149 = por %p147, %p148
    %p151 = scmp.ne.s32.totalorder %s136, %s150
    %p152 = scmp.eq.s32.totalorder %s21, 0
    %p153 = por %p151, %p152
    %s155 = sadd.s32 %s154, 1
    %p158 = scmp.eq.s32.totalorder %s15, 1
    %p159 = scmp.ne.s32.totalorder %s154, %s156
    %p160 = scmp.eq.s32.totalorder %s15, 0
    %p161 = por %p159, %p160
    %p162 = scmp.ne.s32.totalorder %s154, %s156
    %p163 = scmp.eq.s32.totalorder %s20, 1
    %p164 = por %p162, %p163
    %p165 = scmp.ne.s32.totalorder %s156, %s157
    %p166 = scmp.eq.s32.totalorder %s20, 0
    %p167 = por %p165, %p166
    %p168 = scmp.ne.s32.totalorder %s156, %s157
    %p169 = scmp.eq.s32.totalorder %s21, 1
    %p170 = por %p168, %p169
    %p172 = scmp.ne.s32.totalorder %s157, %s171
    %p173 = scmp.eq.s32.totalorder %s21, 0
    %p174 = por %p172, %p173
    %s176 = sadd.s32 %s175, 1
    %p179 = scmp.eq.s32.totalorder %s15, 1
    %p180 = scmp.ne.s32.totalorder %s175, %s177
    %p181 = scmp.eq.s32.totalorder %s15, 0
    %p182 = por %p180, %p181
    %p183 = scmp.ne.s32.totalorder %s175, %s177
    %p184 = scmp.eq.s32.totalorder %s20, 1
    %p185 = por %p183, %p184
    %p186 = scmp.ne.s32.totalorder %s177, %s178
    %p187 = scmp.eq.s32.totalorder %s20, 0
    %p188 = por %p186, %p187
    %p189 = scmp.ne.s32.totalorder %s177, %s178
    %p190 = scmp.eq.s32.totalorder %s21, 1
    %p191 = por %p189, %p190
    %p193 = scmp.ne.s32.totalorder %s178, %s192
    %p194 = scmp.eq.s32.totalorder %s21, 0
    %p195 = por %p193, %p194
    %s197 = sadd.s32 %s196, 1
    %p200 = scmp.eq.s32.totalorder %s15, 1
    %p201 = scmp.ne.s32.totalorder %s196, %s198
    %p202 = scmp.eq.s32.totalorder %s15, 0
    %p203 = por %p201, %p202
    %p204 = scmp.ne.s32.totalorder %s196, %s198
    %p205 = scmp.eq.s32.totalorder %s20, 1
    %p206 = por %p204, %p205
    %p207 = scmp.ne.s32.totalorder %s198, %s199
    %p208 = scmp.eq.s32.totalorder %s20, 0
    %p209 = por %p207, %p208
    %p210 = scmp.ne.s32.totalorder %s198, %s199
    %p211 = scmp.eq.s32.totalorder %s21, 1
    %p212 = por %p210, %p211
    %p214 = scmp.ne.s32.totalorder %s199, %s213
    %p215 = scmp.eq.s32.totalorder %s21, 0
    %p216 = por %p214, %p215
    %s217 = ssub.s32 %s15, %s22
    %p218 = scmp.eq.s32.totalorder %s217, 0
    %s220 = sadd.s32 %s219, 1
    %s221 = scalar_select %p218, %s219, %s220
    %p224 = pneg %p218
    %p225 = scmp.eq.s32.totalorder %s15, 1
    %p226 = por %p224, %p225
    %p227 = scmp.ne.s32.totalorder %s219, %s222
    %p228 = scmp.eq.s32.totalorder %s15, 0
    %p229 = por %p227, %p228
    %p230 = scmp.ne.s32.totalorder %s219, %s222
    %p231 = scmp.eq.s32.totalorder %s20, 1
    %p232 = por %p230, %p231
    %p233 = scmp.ne.s32.totalorder %s222, %s223
    %p234 = scmp.eq.s32.totalorder %s20, 0
    %p235 = por %p233, %p234
    %p236 = scmp.ne.s32.totalorder %s222, %s223
    %p237 = scmp.eq.s32.totalorder %s21, 1
    %p238 = por %p236, %p237
    %p240 = scmp.ne.s32.totalorder %s223, %s239
    %p241 = scmp.eq.s32.totalorder %s21, 0
    %p242 = por %p240, %p241
    %p243 = scmp.le.s32.totalorder 1, %s15
    %p244 = scmp.lt.s32.totalorder %s15, 3
    %p245 = pnand %p243, %p244
    %p246 = pneg %p245
    // Predicated region
    $region9: #{tpu_custom_call.1} parent=5 // pred_check
      _
    $region10: #{tpu_custom_call.1} parent=5 // pred_check_branch
      %248 = sbr.rel (%p245) target = $region12
    $region11: #{tpu_custom_call.1} parent=5 // pred_region
      %s249 = ssub.s32 %s15, 1
      // Predicated region
      $region13: #{tpu_custom_call.1} parent=11 // pred_check
        %p250 = pneg %p62
      $region14: #{tpu_custom_call.1} parent=11 // pred_check_branch
        %252 = sbr.rel (%p250) target = $region16
      $region15: #{tpu_custom_call.1} parent=11 // pred_region
        _
      $region16: #{tpu_custom_call.1} parent=11 // pred_fallthru
        _
      // Predicated region
      $region17: #{tpu_custom_call.1} parent=11 // pred_check
        %p253 = pneg %p83
      $region18: #{tpu_custom_call.1} parent=11 // pred_check_branch
        %255 = sbr.rel (%p253) target = $region20
      $region19: #{tpu_custom_call.1} parent=11 // pred_region
        _
      $region20: #{tpu_custom_call.1} parent=11 // pred_fallthru
        _
      // Predicated region
      $region21: #{tpu_custom_call.1} parent=11 // pred_check
        %p256 = pneg %p104
      $region22: #{tpu_custom_call.1} parent=11 // pred_check_branch
        %258 = sbr.rel (%p256) target = $region24
      $region23: #{tpu_custom_call.1} parent=11 // pred_region
        _
      $region24: #{tpu_custom_call.1} parent=11 // pred_fallthru
        _
      // Predicated region
      $region25: #{tpu_custom_call.1} parent=11 // pred_check
        %p259 = pneg %p125
      $region26: #{tpu_custom_call.1} parent=11 // pred_check_branch
        %261 = sbr.rel (%p259) target = $region28
      $region27: #{tpu_custom_call.1} parent=11 // pred_region
        _
      $region28: #{tpu_custom_call.1} parent=11 // pred_fallthru
        _
      // Predicated region
      $region29: #{tpu_custom_call.1} parent=11 // pred_check
        %p262 = pneg %p146
      $region30: #{tpu_custom_call.1} parent=11 // pred_check_branch
        %264 = sbr.rel (%p262) target = $region32
      $region31: #{tpu_custom_call.1} parent=11 // pred_region
        _
      $region32: #{tpu_custom_call.1} parent=11 // pred_fallthru
        _
      // Predicated region
      $region33: #{tpu_custom_call.1} parent=11 // pred_check
        %p265 = pneg %p167
      $region34: #{tpu_custom_call.1} parent=11 // pred_check_branch
        %267 = sbr.rel (%p265) target = $region36
      $region35: #{tpu_custom_call.1} parent=11 // pred_region
        _
      $region36: #{tpu_custom_call.1} parent=11 // pred_fallthru
        _
      // Predicated region
      $region37: #{tpu_custom_call.1} parent=11 // pred_check
        %p268 = pneg %p188
      $region38: #{tpu_custom_call.1} parent=11 // pred_check_branch
        %270 = sbr.rel (%p268) target = $region40
      $region39: #{tpu_custom_call.1} parent=11 // pred_region
        _
      $region40: #{tpu_custom_call.1} parent=11 // pred_fallthru
        _
      // Predicated region
      $region41: #{tpu_custom_call.1} parent=11 // pred_check
        %p271 = pneg %p209
      $region42: #{tpu_custom_call.1} parent=11 // pred_check_branch
        %273 = sbr.rel (%p271) target = $region44
      $region43: #{tpu_custom_call.1} parent=11 // pred_region
        _
      $region44: #{tpu_custom_call.1} parent=11 // pred_fallthru
        _
    $region12: #{tpu_custom_call.1} parent=5 // pred_fallthru
      _
    %p274 = scmp.lt.s32.totalorder %s15, 2
    // Predicated region
    $region45: #{tpu_custom_call.1} parent=5 // pred_check
      %p275 = pneg %p274
    $region46: #{tpu_custom_call.1} parent=5 // pred_check_branch
      %277 = sbr.rel (%p275) target = $region48
    $region47: #{tpu_custom_call.1} parent=5 // pred_region
      // Predicated region
      $region49: #{tpu_custom_call.1} parent=47 // pred_check
        %p278 = pneg %p35
      $region50: #{tpu_custom_call.1} parent=47 // pred_check_branch
        %280 = sbr.rel (%p278) target = $region52
      $region51: #{tpu_custom_call.1} parent=47 // pred_region
        %s281 = smul.u32 4, %s15
        %p282 = scmp.lt.s32.totalorder %s281, 7
        %s283 = scalar_select %p282, %s281, 7
        %s284 = smul.addr %s283, 4
        %s285 = smul.addr %s284, 8
        %s286 = scalar_lea.vmem %s0, %s285
        %s287 = smul.u32 4, %s15
      $region52: #{tpu_custom_call.1} parent=47 // pred_fallthru
        _
    $region48: #{tpu_custom_call.1} parent=5 // pred_fallthru
      _
    %p288 = scmp.le.s32.totalorder 1, %s15
    %p289 = scmp.lt.s32.totalorder %s15, 3
    %p290 = pnand %p288, %p289
    %p291 = pneg %p290
    // Predicated region
    $region53: #{tpu_custom_call.1} parent=5 // pred_check
      _
    $region54: #{tpu_custom_call.1} parent=5 // pred_check_branch
      %293 = sbr.rel (%p290) target = $region56
    $region55: #{tpu_custom_call.1} parent=5 // pred_region
      %s294 = ssub.s32 %s15, 1
      %s295 = smul.u32 4, %s20
      %p296 = scmp.lt.s32.totalorder %s295, 7
      %s297 = scalar_select %p296, %s295, 7
      %s298 = smul.addr %s297, 4
      %s299 = smul.addr %s298, 8
      %s300 = scalar_lea.vmem %s0, %s299
      %p301 = pneg %p41
      %p302 = pneg %p38
      %p303 = pneg %p62
      %p304 = pneg %p59
      %p305 = pneg %p83
      %p306 = pneg %p80
      %p307 = pneg %p104
      %p308 = pneg %p101
      %p309 = pneg %p125
      %p310 = pneg %p122
      %p311 = pneg %p146
      %p312 = pneg %p143
      %p313 = pneg %p167
      %p314 = pneg %p164
      %p315 = pneg %p188
      %p316 = pneg %p185
      %p317 = pneg %p209
      %p318 = pneg %p206
      %p319 = pneg %p235
      %p320 = pneg %p232
      %s321 = smul.u32 4, %s20
      %p322 = scmp.lt.s32.totalorder %s321, 7
      %s323 = scalar_select %p322, %s321, 7
      %s324 = smul.addr %s323, 4
      %s325 = smul.addr %s324, 8
      %s326 = scalar_lea.vmem %s9, %s325
      %s327 = smul.u32 4, %s20
      %p328 = scmp.lt.s32.totalorder %s327, 7
      %s329 = scalar_select %p328, %s327, 7
      %s330 = smul.addr %s329, 4
      %s331 = smul.addr %s330, 8
      %s332 = scalar_lea.vmem %s0, %s331
      %s333 = smul.u32 4, %s20
      %s334 = smul.u32 4, %s20
      %p335 = scmp.lt.s32.totalorder %s334, 7
      %s336 = scalar_select %p335, %s334, 7
      %s337 = smul.addr %s336, 4
      %s338 = smul.addr %s337, 8
      %s339 = scalar_lea.vmem %s9, %s338
      %s340 = smul.u32 4, %s20
      %v341 = vld [vmem:[%s332] sm:$0xff]
      %v342 = vld [vmem:[%s332 + $0x8] sm:$0xff]
      %v343 = vld [vmem:[%s332 + $0x10] sm:$0x3f]
      %v344 = vld [vmem:[%s332 + $0x18] sm:$0x3f]
      %s345 = scalar_lea.vmem %s332, 32
      %v346 = vld [vmem:[%s345] sm:$0xff]
      %v347 = vld [vmem:[%s345 + $0x8] sm:$0xff]
      %v348 = vld [vmem:[%s345 + $0x10] sm:$0x3f]
      %v349 = vld [vmem:[%s345 + $0x18] sm:$0x3f]
      %s350 = scalar_lea.vmem %s332, 64
      %v351 = vld [vmem:[%s350] sm:$0xff]
      %v352 = vld [vmem:[%s350 + $0x8] sm:$0xff]
      %v353 = vld [vmem:[%s350 + $0x10] sm:$0x3f]
      %v354 = vld [vmem:[%s350 + $0x18] sm:$0x3f]
      %s355 = scalar_lea.vmem %s332, 96
      %v356 = vld [vmem:[%s355] sm:$0xff]
      %v357 = vld [vmem:[%s355 + $0x8] sm:$0xff]
      %v358 = vld [vmem:[%s355 + $0x10] sm:$0x3f]
      %v359 = vld [vmem:[%s355 + $0x18] sm:$0x3f]
      %v360 = vlaneseq
      %v361 = vand.u32 %v360, 127
      %v362 = vadd.s32 %v361, 128
      %v363 = vadd.s32 %v361, 256
      %v364 = vadd.s32 %v361, 384
      %v365 = vadd.s32 %v361, 512
      %v366 = vadd.s32 %v361, 640
      %v367 = vadd.s32 %v361, 768
      %v368 = vadd.s32 %v361, 896
      %v369 = vand.u32 %v361, 15
      %v370 = vand.u32 %v362, 15
      %v371 = vand.u32 %v363, 15
      %v372 = vand.u32 %v364, 15
      %v373 = vand.u32 %v365, 15
      %v374 = vand.u32 %v366, 15
      %v375 = vand.u32 %v367, 15
      %v376 = vand.u32 %v368, 15
      %v377 = vshra.s32 %v361, 4
      %v378 = vshra.s32 %v362, 4
      %v379 = vshra.s32 %v363, 4
      %v380 = vshra.s32 %v364, 4
      %v381 = vshra.s32 %v365, 4
      %v382 = vshra.s32 %v366, 4
      %v383 = vshra.s32 %v367, 4
      %v384 = vshra.s32 %v368, 4
      %v385 = vand.u32 %v377, 15
      %v386 = vand.u32 %v378, 15
      %v387 = vand.u32 %v379, 15
      %v388 = vand.u32 %v380, 15
      %v389 = vand.u32 %v381, 15
      %v390 = vand.u32 %v382, 15
      %v391 = vand.u32 %v383, 15
      %v392 = vand.u32 %v384, 15
      %vm393 = vcmp.eq.s32.totalorder %v385, 0
      %vm394 = vcmp.eq.s32.totalorder %v386, 0
      %vm395 = vcmp.eq.s32.totalorder %v387, 0
      %vm396 = vcmp.eq.s32.totalorder %v388, 0
      %vm397 = vcmp.eq.s32.totalorder %v389, 0
      %vm398 = vcmp.eq.s32.totalorder %v390, 0
      %vm399 = vcmp.eq.s32.totalorder %v391, 0
      %vm400 = vcmp.eq.s32.totalorder %v392, 0
      %vm401 = vcmp.eq.s32.totalorder %v385, 15
      %vm402 = vcmp.eq.s32.totalorder %v386, 15
      %vm403 = vcmp.eq.s32.totalorder %v387, 15
      %vm404 = vcmp.eq.s32.totalorder %v388, 15
      %vm405 = vcmp.eq.s32.totalorder %v389, 15
      %vm406 = vcmp.eq.s32.totalorder %v390, 15
      %vm407 = vcmp.eq.s32.totalorder %v391, 15
      %vm408 = vcmp.eq.s32.totalorder %v392, 15
      %vm409 = vcmp.eq.s32.totalorder %v369, 0
      %vm410 = vcmp.eq.s32.totalorder %v370, 0
      %vm411 = vcmp.eq.s32.totalorder %v371, 0
      %vm412 = vcmp.eq.s32.totalorder %v372, 0
      %vm413 = vcmp.eq.s32.totalorder %v373, 0
      %vm414 = vcmp.eq.s32.totalorder %v374, 0
      %vm415 = vcmp.eq.s32.totalorder %v375, 0
      %vm416 = vcmp.eq.s32.totalorder %v376, 0
      %vm417 = vcmp.eq.s32.totalorder %v369, 15
      %vm418 = vcmp.eq.s32.totalorder %v370, 15
      %vm419 = vcmp.eq.s32.totalorder %v371, 15
      %vm420 = vcmp.eq.s32.totalorder %v372, 15
      %vm421 = vcmp.eq.s32.totalorder %v373, 15
      %vm422 = vcmp.eq.s32.totalorder %v374, 15
      %vm423 = vcmp.eq.s32.totalorder %v375, 15
      %vm424 = vcmp.eq.s32.totalorder %v376, 15
      %v425 = vld [vmem:[%s1] sm:$0x7f]
      %v426 = vld [vmem:[%s2] sm:$0x7f]
      %428 = vset.pattern.permute.xlu0 0
      %429 = vperm.xlu0 %428, %v426
      %v430 = vpop.permute.xlu0 %429
      %vm432 = vcmask 113664
      %v434 = vsel %vm432, %v425, 0
      %vm436 = vcmask 1045504
      %v438 = vsel %vm436, %v343, 0
      %v441 = vsel %vm436, %v344, 0
      %v444 = vsel %vm436, %v348, 0
      %v447 = vsel %vm436, %v349, 0
      %v450 = vsel %vm436, %v353, 0
      %v453 = vsel %vm436, %v354, 0
      %v456 = vsel %vm436, %v358, 0
      %v459 = vsel %vm436, %v359, 0
      %461 = vmatpush.msra.mxu0 0.0
      %462 = vmatpush.msra.mxu0 0.0
      %463 = vmatpush.msra.mxu0 0.0
      %464 = vmatpush.msra.mxu0 0.0
      %465 = vmatpush.msra.mxu0 0.0
      %466 = vmatpush.msra.mxu0 0.0
      %467 = vmatpush.msra.mxu0 0.0
      %468 = vmatpush.msra.mxu0 0.0
      %469 = vmatpush.msra.mxu0 0.0
      %470 = vmatpush.msra.mxu0 0.0
      %471 = vmatpush.msra.mxu0 0.0
      %472 = vmatpush.msra.mxu0 0.0
      %473 = vmatpush.msra.mxu0 0.0
      %474 = vmatpush.msra.mxu0 0.0
      %475 = vmatpush.msra.mxu0 %v438
      %476 = vmatpush.msra.mxu0 %v341
      %477 = vmatmul.f32.gmra.mxu0 %v434
      %v478 = vpop.f32.mrf.mxu0
      %v479 = vadd.f32 %v430, %v478
      %480 = vdwg.mxu0
      %481 = vmatpush.msra.mxu0 0.0
      %482 = vmatpush.msra.mxu0 0.0
      %483 = vmatpush.msra.mxu0 0.0
      %484 = vmatpush.msra.mxu0 0.0
      %485 = vmatpush.msra.mxu0 0.0
      %486 = vmatpush.msra.mxu0 0.0
      %487 = vmatpush.msra.mxu0 0.0
      %488 = vmatpush.msra.mxu0 0.0
      %489 = vmatpush.msra.mxu0 0.0
      %490 = vmatpush.msra.mxu0 0.0
      %491 = vmatpush.msra.mxu0 0.0
      %492 = vmatpush.msra.mxu0 0.0
      %493 = vmatpush.msra.mxu0 0.0
      %494 = vmatpush.msra.mxu0 0.0
      %495 = vmatpush.msra.mxu0 %v441
      %496 = vmatpush.msra.mxu0 %v342
      %497 = vmatmul.f32.gmra.mxu0 %v434
      %v498 = vpop.f32.mrf.mxu0
      %v499 = vadd.f32 %v430, %v498
      %500 = vdwg.mxu0
      %501 = vmatpush.msra.mxu0 0.0
      %502 = vmatpush.msra.mxu0 0.0
      %503 = vmatpush.msra.mxu0 0.0
      %504 = vmatpush.msra.mxu0 0.0
      %505 = vmatpush.msra.mxu0 0.0
      %506 = vmatpush.msra.mxu0 0.0
      %507 = vmatpush.msra.mxu0 0.0
      %508 = vmatpush.msra.mxu0 0.0
      %509 = vmatpush.msra.mxu0 0.0
      %510 = vmatpush.msra.mxu0 0.0
      %511 = vmatpush.msra.mxu0 0.0
      %512 = vmatpush.msra.mxu0 0.0
      %513 = vmatpush.msra.mxu0 0.0
      %514 = vmatpush.msra.mxu0 0.0
      %515 = vmatpush.msra.mxu0 %v444
      %516 = vmatpush.msra.mxu0 %v346
      %517 = vmatmul.f32.gmra.mxu0 %v434
      %v518 = vpop.f32.mrf.mxu0
      %v519 = vadd.f32 %v430, %v518
      %520 = vdwg.mxu0
      %521 = vmatpush.msra.mxu0 0.0
      %522 = vmatpush.msra.mxu0 0.0
      %523 = vmatpush.msra.mxu0 0.0
      %524 = vmatpush.msra.mxu0 0.0
      %525 = vmatpush.msra.mxu0 0.0
      %526 = vmatpush.msra.mxu0 0.0
      %527 = vmatpush.msra.mxu0 0.0
      %528 = vmatpush.msra.mxu0 0.0
      %529 = vmatpush.msra.mxu0 0.0
      %530 = vmatpush.msra.mxu0 0.0
      %531 = vmatpush.msra.mxu0 0.0
      %532 = vmatpush.msra.mxu0 0.0
      %533 = vmatpush.msra.mxu0 0.0
      %534 = vmatpush.msra.mxu0 0.0
      %535 = vmatpush.msra.mxu0 %v447
      %536 = vmatpush.msra.mxu0 %v347
      %537 = vmatmul.f32.gmra.mxu0 %v434
      %v538 = vpop.f32.mrf.mxu0
      %v539 = vadd.f32 %v430, %v538
      %540 = vdwg.mxu0
      %541 = vmatpush.msra.mxu0 0.0
      %542 = vmatpush.msra.mxu0 0.0
      %543 = vmatpush.msra.mxu0 0.0
      %544 = vmatpush.msra.mxu0 0.0
      %545 = vmatpush.msra.mxu0 0.0
      %546 = vmatpush.msra.mxu0 0.0
      %547 = vmatpush.msra.mxu0 0.0
      %548 = vmatpush.msra.mxu0 0.0
      %549 = vmatpush.msra.mxu0 0.0
      %550 = vmatpush.msra.mxu0 0.0
      %551 = vmatpush.msra.mxu0 0.0
      %552 = vmatpush.msra.mxu0 0.0
      %553 = vmatpush.msra.mxu0 0.0
      %554 = vmatpush.msra.mxu0 0.0
      %555 = vmatpush.msra.mxu0 %v450
      %556 = vmatpush.msra.mxu0 %v351
      %557 = vmatmul.f32.gmra.mxu0 %v434
      %v558 = vpop.f32.mrf.mxu0
      %v559 = vadd.f32 %v430, %v558
      %560 = vdwg.mxu0
      %561 = vmatpush.msra.mxu0 0.0
      %562 = vmatpush.msra.mxu0 0.0
      %563 = vmatpush.msra.mxu0 0.0
      %564 = vmatpush.msra.mxu0 0.0
      %565 = vmatpush.msra.mxu0 0.0
      %566 = vmatpush.msra.mxu0 0.0
      %567 = vmatpush.msra.mxu0 0.0
      %568 = vmatpush.msra.mxu0 0.0
      %569 = vmatpush.msra.mxu0 0.0
      %570 = vmatpush.msra.mxu0 0.0
      %571 = vmatpush.msra.mxu0 0.0
      %572 = vmatpush.msra.mxu0 0.0
      %573 = vmatpush.msra.mxu0 0.0
      %574 = vmatpush.msra.mxu0 0.0
      %575 = vmatpush.msra.mxu0 %v453
      %576 = vmatpush.msra.mxu0 %v352
      %577 = vmatmul.f32.gmra.mxu0 %v434
      %v578 = vpop.f32.mrf.mxu0
      %v579 = vadd.f32 %v430, %v578
      %580 = vdwg.mxu0
      %581 = vmatpush.msra.mxu0 0.0
      %582 = vmatpush.msra.mxu0 0.0
      %583 = vmatpush.msra.mxu0 0.0
      %584 = vmatpush.msra.mxu0 0.0
      %585 = vmatpush.msra.mxu0 0.0
      %586 = vmatpush.msra.mxu0 0.0
      %587 = vmatpush.msra.mxu0 0.0
      %588 = vmatpush.msra.mxu0 0.0
      %589 = vmatpush.msra.mxu0 0.0
      %590 = vmatpush.msra.mxu0 0.0
      %591 = vmatpush.msra.mxu0 0.0
      %592 = vmatpush.msra.mxu0 0.0
      %593 = vmatpush.msra.mxu0 0.0
      %594 = vmatpush.msra.mxu0 0.0
      %595 = vmatpush.msra.mxu0 %v456
      %596 = vmatpush.msra.mxu0 %v356
      %597 = vmatmul.f32.gmra.mxu0 %v434
      %v598 = vpop.f32.mrf.mxu0
      %v599 = vadd.f32 %v430, %v598
      %600 = vdwg.mxu0
      %601 = vmatpush.msra.mxu0 0.0
      %602 = vmatpush.msra.mxu0 0.0
      %603 = vmatpush.msra.mxu0 0.0
      %604 = vmatpush.msra.mxu0 0.0
      %605 = vmatpush.msra.mxu0 0.0
      %606 = vmatpush.msra.mxu0 0.0
      %607 = vmatpush.msra.mxu0 0.0
      %608 = vmatpush.msra.mxu0 0.0
      %609 = vmatpush.msra.mxu0 0.0
      %610 = vmatpush.msra.mxu0 0.0
      %611 = vmatpush.msra.mxu0 0.0
      %612 = vmatpush.msra.mxu0 0.0
      %613 = vmatpush.msra.mxu0 0.0
      %614 = vmatpush.msra.mxu0 0.0
      %615 = vmatpush.msra.mxu0 %v459
      %616 = vmatpush.msra.mxu0 %v357
      %617 = vmatmul.f32.gmra.mxu0 %v434
      %v618 = vpop.f32.mrf.mxu0
      %v619 = vadd.f32 %v430, %v618
      %620 = vdwg.mxu0
      %v621 = vmax.f32 %v479, 0.0
      %v622 = vmax.f32 %v499, 0.0
      %v623 = vmax.f32 %v519, 0.0
      %v624 = vmax.f32 %v539, 0.0
      %v625 = vmax.f32 %v559, 0.0
      %v626 = vmax.f32 %v579, 0.0
      %v627 = vmax.f32 %v599, 0.0
      %v628 = vmax.f32 %v619, 0.0
      %v629 = vmax.f32 %v426, 0.0
      %630 = vrot.lane.b32.xlu0 %v621, 16
      %v631 = vpop.permute.xlu0 %630
      %632 = vrot.lane.b32.xlu0 %v622, 16
      %v633 = vpop.permute.xlu0 %632
      %634 = vrot.lane.b32.xlu0 %v623, 16
      %v635 = vpop.permute.xlu0 %634
      %636 = vrot.lane.b32.xlu0 %v624, 16
      %v637 = vpop.permute.xlu0 %636
      %638 = vrot.lane.b32.xlu0 %v625, 16
      %v639 = vpop.permute.xlu0 %638
      %640 = vrot.lane.b32.xlu0 %v626, 16
      %v641 = vpop.permute.xlu0 %640
      %642 = vrot.lane.b32.xlu0 %v627, 16
      %v643 = vpop.permute.xlu0 %642
      %644 = vrot.lane.b32.xlu0 %v628, 16
      %v645 = vpop.permute.xlu0 %644
      %vm646 = vcmp.lt.s32.totalorder %v361, 16
      %v647 = vsel %vm646, %v643, %v645
      %v648 = vsel %vm646, %v641, %v643
      %v649 = vsel %vm646, %v639, %v641
      %v650 = vsel %vm646, %v637, %v639
      %v651 = vsel %vm646, %v635, %v637
      %v652 = vsel %vm646, %v633, %v635
      %v653 = vsel %vm646, %v631, %v633
      %v654 = vsel %vm646, %v645, %v631
      %v655 = vsel %vm393, 1, 0
      %v656 = vsel %vm394, 1, 0
      %v657 = vsel %vm395, 1, 0
      %v658 = vsel %vm396, 1, 0
      %v659 = vsel %vm397, 1, 0
      %v660 = vsel %vm398, 1, 0
      %v661 = vsel %vm399, 1, 0
      %v662 = vsel %vm400, 1, 0
      %vm663 = vcmp.eq.s32.totalorder %v655, 1
      %vm664 = vcmp.eq.s32.totalorder %v656, 1
      %vm665 = vcmp.eq.s32.totalorder %v657, 1
      %vm666 = vcmp.eq.s32.totalorder %v658, 1
      %vm667 = vcmp.eq.s32.totalorder %v659, 1
      %vm668 = vcmp.eq.s32.totalorder %v660, 1
      %vm669 = vcmp.eq.s32.totalorder %v661, 1
      %vm670 = vcmp.eq.s32.totalorder %v662, 1
      %672 = vset.pattern.permute.xlu0 0
      %673 = vperm.xlu0 %672, %v629
      %v674 = vpop.permute.xlu0 %673
      %v676 = vsel %vm663, %v674, %v654
      %v677 = vsel %vm664, %v674, %v653
      %v678 = vsel %vm665, %v674, %v652
      %v679 = vsel %vm666, %v674, %v651
      %v680 = vsel %vm667, %v674, %v650
      %v681 = vsel %vm668, %v674, %v649
      %v682 = vsel %vm669, %v674, %v648
      %v683 = vsel %vm670, %v674, %v647
      %684 = vrot.lane.b32.xlu0 %v621, 112
      %v685 = vpop.permute.xlu0 %684
      %686 = vrot.lane.b32.xlu0 %v622, 112
      %v687 = vpop.permute.xlu0 %686
      %688 = vrot.lane.b32.xlu0 %v623, 112
      %v689 = vpop.permute.xlu0 %688
      %690 = vrot.lane.b32.xlu0 %v624, 112
      %v691 = vpop.permute.xlu0 %690
      %692 = vrot.lane.b32.xlu0 %v625, 112
      %v693 = vpop.permute.xlu0 %692
      %694 = vrot.lane.b32.xlu0 %v626, 112
      %v695 = vpop.permute.xlu0 %694
      %696 = vrot.lane.b32.xlu0 %v627, 112
      %v697 = vpop.permute.xlu0 %696
      %698 = vrot.lane.b32.xlu0 %v628, 112
      %v699 = vpop.permute.xlu0 %698
      %vm700 = vcmp.lt.s32.totalorder %v361, 112
      %v701 = vsel %vm700, %v697, %v699
      %v702 = vsel %vm700, %v695, %v697
      %v703 = vsel %vm700, %v693, %v695
      %v704 = vsel %vm700, %v691, %v693
      %v705 = vsel %vm700, %v689, %v691
      %v706 = vsel %vm700, %v687, %v689
      %v707 = vsel %vm700, %v685, %v687
      %v708 = vsel %vm700, %v699, %v685
      %v709 = vsel %vm401, 1, 0
      %v710 = vsel %vm402, 1, 0
      %v711 = vsel %vm403, 1, 0
      %v712 = vsel %vm404, 1, 0
      %v713 = vsel %vm405, 1, 0
      %v714 = vsel %vm406, 1, 0
      %v715 = vsel %vm407, 1, 0
      %v716 = vsel %vm408, 1, 0
      %vm717 = vcmp.eq.s32.totalorder %v709, 1
      %vm718 = vcmp.eq.s32.totalorder %v710, 1
      %vm719 = vcmp.eq.s32.totalorder %v711, 1
      %vm720 = vcmp.eq.s32.totalorder %v712, 1
      %vm721 = vcmp.eq.s32.totalorder %v713, 1
      %vm722 = vcmp.eq.s32.totalorder %v714, 1
      %vm723 = vcmp.eq.s32.totalorder %v715, 1
      %vm724 = vcmp.eq.s32.totalorder %v716, 1
      %v725 = vsel %vm717, %v674, %v707
      %v726 = vsel %vm718, %v674, %v706
      %v727 = vsel %vm719, %v674, %v705
      %v728 = vsel %vm720, %v674, %v704
      %v729 = vsel %vm721, %v674, %v703
      %v730 = vsel %vm722, %v674, %v702
      %v731 = vsel %vm723, %v674, %v701
      %v732 = vsel %vm724, %v674, %v708
      %v733 = vmax.f32 %v676, %v621
      %v734 = vmax.f32 %v677, %v622
      %v735 = vmax.f32 %v678, %v623
      %v736 = vmax.f32 %v679, %v624
      %v737 = vmax.f32 %v680, %v625
      %v738 = vmax.f32 %v681, %v626
      %v739 = vmax.f32 %v682, %v627
      %v740 = vmax.f32 %v683, %v628
      %v741 = vmax.f32 %v621, %v725
      %v742 = vmax.f32 %v622, %v726
      %v743 = vmax.f32 %v623, %v727
      %v744 = vmax.f32 %v624, %v728
      %v745 = vmax.f32 %v625, %v729
      %v746 = vmax.f32 %v626, %v730
      %v747 = vmax.f32 %v627, %v731
      %v748 = vmax.f32 %v628, %v732
      %749 = vrot.lane.b32.xlu0 %v733, 1
      %v750 = vpop.permute.xlu0 %749
      %751 = vrot.lane.b32.xlu0 %v734, 1
      %v752 = vpop.permute.xlu0 %751
      %753 = vrot.lane.b32.xlu0 %v735, 1
      %v754 = vpop.permute.xlu0 %753
      %755 = vrot.lane.b32.xlu0 %v736, 1
      %v756 = vpop.permute.xlu0 %755
      %757 = vrot.lane.b32.xlu0 %v737, 1
      %v758 = vpop.permute.xlu0 %757
      %759 = vrot.lane.b32.xlu0 %v738, 1
      %v760 = vpop.permute.xlu0 %759
      %761 = vrot.lane.b32.xlu0 %v739, 1
      %v762 = vpop.permute.xlu0 %761
      %763 = vrot.lane.b32.xlu0 %v740, 1
      %v764 = vpop.permute.xlu0 %763
      %vm765 = vcmp.lt.s32.totalorder %v361, 1
      %v766 = vsel %vm765, %v762, %v764
      %v767 = vsel %vm765, %v760, %v762
      %v768 = vsel %vm765, %v758, %v760
      %v769 = vsel %vm765, %v756, %v758
      %v770 = vsel %vm765, %v754, %v756
      %v771 = vsel %vm765, %v752, %v754
      %v772 = vsel %vm765, %v750, %v752
      %v773 = vsel %vm765, %v764, %v750
      %v774 = vsel %vm409, 1, 0
      %v775 = vsel %vm410, 1, 0
      %v776 = vsel %vm411, 1, 0
      %v777 = vsel %vm412, 1, 0
      %v778 = vsel %vm413, 1, 0
      %v779 = vsel %vm414, 1, 0
      %v780 = vsel %vm415, 1, 0
      %v781 = vsel %vm416, 1, 0
      %vm782 = vcmp.eq.s32.totalorder %v774, 1
      %vm783 = vcmp.eq.s32.totalorder %v775, 1
      %vm784 = vcmp.eq.s32.totalorder %v776, 1
      %vm785 = vcmp.eq.s32.totalorder %v777, 1
      %vm786 = vcmp.eq.s32.totalorder %v778, 1
      %vm787 = vcmp.eq.s32.totalorder %v779, 1
      %vm788 = vcmp.eq.s32.totalorder %v780, 1
      %vm789 = vcmp.eq.s32.totalorder %v781, 1
      %v790 = vsel %vm782, %v674, %v773
      %v791 = vsel %vm783, %v674, %v772
      %v792 = vsel %vm784, %v674, %v771
      %v793 = vsel %vm785, %v674, %v770
      %v794 = vsel %vm786, %v674, %v769
      %v795 = vsel %vm787, %v674, %v768
      %v796 = vsel %vm788, %v674, %v767
      %v797 = vsel %vm789, %v674, %v766
      %798 = vrot.lane.b32.xlu0 %v733, 127
      %v799 = vpop.permute.xlu0 %798
      %800 = vrot.lane.b32.xlu0 %v734, 127
      %v801 = vpop.permute.xlu0 %800
      %802 = vrot.lane.b32.xlu0 %v735, 127
      %v803 = vpop.permute.xlu0 %802
      %804 = vrot.lane.b32.xlu0 %v736, 127
      %v805 = vpop.permute.xlu0 %804
      %806 = vrot.lane.b32.xlu0 %v737, 127
      %v807 = vpop.permute.xlu0 %806
      %808 = vrot.lane.b32.xlu0 %v738, 127
      %v809 = vpop.permute.xlu0 %808
      %810 = vrot.lane.b32.xlu0 %v739, 127
      %v811 = vpop.permute.xlu0 %810
      %812 = vrot.lane.b32.xlu0 %v740, 127
      %v813 = vpop.permute.xlu0 %812
      %vm814 = vcmp.lt.s32.totalorder %v361, 127
      %v815 = vsel %vm814, %v811, %v813
      %v816 = vsel %vm814, %v809, %v811
      %v817 = vsel %vm814, %v807, %v809
      %v818 = vsel %vm814, %v805, %v807
      %v819 = vsel %vm814, %v803, %v805
      %v820 = vsel %vm814, %v801, %v803
      %v821 = vsel %vm814, %v799, %v801
      %v822 = vsel %vm814, %v813, %v799
      %v823 = vsel %vm417, 1, 0
      %v824 = vsel %vm418, 1, 0
      %v825 = vsel %vm419, 1, 0
      %v826 = vsel %vm420, 1, 0
      %v827 = vsel %vm421, 1, 0
      %v828 = vsel %vm422, 1, 0
      %v829 = vsel %vm423, 1, 0
      %v830 = vsel %vm424, 1, 0
      %vm831 = vcmp.eq.s32.totalorder %v823, 1
      %vm832 = vcmp.eq.s32.totalorder %v824, 1
      %vm833 = vcmp.eq.s32.totalorder %v825, 1
      %vm834 = vcmp.eq.s32.totalorder %v826, 1
      %vm835 = vcmp.eq.s32.totalorder %v827, 1
      %vm836 = vcmp.eq.s32.totalorder %v828, 1
      %vm837 = vcmp.eq.s32.totalorder %v829, 1
      %vm838 = vcmp.eq.s32.totalorder %v830, 1
      %v839 = vsel %vm831, %v674, %v821
      %v840 = vsel %vm832, %v674, %v820
      %v841 = vsel %vm833, %v674, %v819
      %v842 = vsel %vm834, %v674, %v818
      %v843 = vsel %vm835, %v674, %v817
      %v844 = vsel %vm836, %v674, %v816
      %v845 = vsel %vm837, %v674, %v815
      %v846 = vsel %vm838, %v674, %v822
      %v847 = vmax.f32 %v790, %v733
      %v848 = vmax.f32 %v791, %v734
      %v849 = vmax.f32 %v792, %v735
      %v850 = vmax.f32 %v793, %v736
      %v851 = vmax.f32 %v794, %v737
      %v852 = vmax.f32 %v795, %v738
      %v853 = vmax.f32 %v796, %v739
      %v854 = vmax.f32 %v797, %v740
      %v855 = vmax.f32 %v733, %v839
      %v856 = vmax.f32 %v734, %v840
      %v857 = vmax.f32 %v735, %v841
      %v858 = vmax.f32 %v736, %v842
      %v859 = vmax.f32 %v737, %v843
      %v860 = vmax.f32 %v738, %v844
      %v861 = vmax.f32 %v739, %v845
      %v862 = vmax.f32 %v740, %v846
      %863 = vrot.lane.b32.xlu0 %v741, 1
      %v864 = vpop.permute.xlu0 %863
      %865 = vrot.lane.b32.xlu0 %v742, 1
      %v866 = vpop.permute.xlu0 %865
      %867 = vrot.lane.b32.xlu0 %v743, 1
      %v868 = vpop.permute.xlu0 %867
      %869 = vrot.lane.b32.xlu0 %v744, 1
      %v870 = vpop.permute.xlu0 %869
      %871 = vrot.lane.b32.xlu0 %v745, 1
      %v872 = vpop.permute.xlu0 %871
      %873 = vrot.lane.b32.xlu0 %v746, 1
      %v874 = vpop.permute.xlu0 %873
      %875 = vrot.lane.b32.xlu0 %v747, 1
      %v876 = vpop.permute.xlu0 %875
      %877 = vrot.lane.b32.xlu0 %v748, 1
      %v878 = vpop.permute.xlu0 %877
      %v879 = vsel %vm765, %v876, %v878
      %v880 = vsel %vm765, %v874, %v876
      %v881 = vsel %vm765, %v872, %v874
      %v882 = vsel %vm765, %v870, %v872
      %v883 = vsel %vm765, %v868, %v870
      %v884 = vsel %vm765, %v866, %v868
      %v885 = vsel %vm765, %v864, %v866
      %v886 = vsel %vm765, %v878, %v864
      %v887 = vsel %vm782, %v674, %v886
      %v888 = vsel %vm783, %v674, %v885
      %v889 = vsel %vm784, %v674, %v884
      %v890 = vsel %vm785, %v674, %v883
      %v891 = vsel %vm786, %v674, %v882
      %v892 = vsel %vm787, %v674, %v881
      %v893 = vsel %vm788, %v674, %v880
      %v894 = vsel %vm789, %v674, %v879
      %895 = vrot.lane.b32.xlu0 %v741, 127
      %v896 = vpop.permute.xlu0 %895
      %897 = vrot.lane.b32.xlu0 %v742, 127
      %v898 = vpop.permute.xlu0 %897
      %899 = vrot.lane.b32.xlu0 %v743, 127
      %v900 = vpop.permute.xlu0 %899
      %901 = vrot.lane.b32.xlu0 %v744, 127
      %v902 = vpop.permute.xlu0 %901
      %903 = vrot.lane.b32.xlu0 %v745, 127
      %v904 = vpop.permute.xlu0 %903
      %905 = vrot.lane.b32.xlu0 %v746, 127
      %v906 = vpop.permute.xlu0 %905
      %907 = vrot.lane.b32.xlu0 %v747, 127
      %v908 = vpop.permute.xlu0 %907
      %909 = vrot.lane.b32.xlu0 %v748, 127
      %v910 = vpop.permute.xlu0 %909
      %v911 = vsel %vm814, %v908, %v910
      %v912 = vsel %vm814, %v906, %v908
      %v913 = vsel %vm814, %v904, %v906
      %v914 = vsel %vm814, %v902, %v904
      %v915 = vsel %vm814, %v900, %v902
      %v916 = vsel %vm814, %v898, %v900
      %v917 = vsel %vm814, %v896, %v898
      %v918 = vsel %vm814, %v910, %v896
      %v919 = vsel %vm831, %v674, %v917
      %v920 = vsel %vm832, %v674, %v916
      %v921 = vsel %vm833, %v674, %v915
      %v922 = vsel %vm834, %v674, %v914
      %v923 = vsel %vm835, %v674, %v913
      %v924 = vsel %vm836, %v674, %v912
      %v925 = vsel %vm837, %v674, %v911
      %v926 = vsel %vm838, %v674, %v918
      %v927 = vmax.f32 %v887, %v741
      %v928 = vmax.f32 %v888, %v742
      %v929 = vmax.f32 %v889, %v743
      %v930 = vmax.f32 %v890, %v744
      %v931 = vmax.f32 %v891, %v745
      %v932 = vmax.f32 %v892, %v746
      %v933 = vmax.f32 %v893, %v747
      %v934 = vmax.f32 %v894, %v748
      %v935 = vmax.f32 %v741, %v919
      %v936 = vmax.f32 %v742, %v920
      %v937 = vmax.f32 %v743, %v921
      %v938 = vmax.f32 %v744, %v922
      %v939 = vmax.f32 %v745, %v923
      %v940 = vmax.f32 %v746, %v924
      %v941 = vmax.f32 %v747, %v925
      %v942 = vmax.f32 %v748, %v926
      %v943 = vld [vmem:[%s3] sm:$0x3]
      %v944 = vld [vmem:[%s4] sm:$0x3]
      %946 = vset.pattern.permute.xlu0 0
      %947 = vperm.xlu0 %946, %v944
      %v948 = vpop.permute.xlu0 %947
      %vm950 = vcmask 56320
      %v952 = vsel %vm950, %v943, 0
      %vm954 = vcmask 1046528
      %v956 = vsel %vm954, %v847, 0
      %v959 = vsel %vm954, %v848, 0
      %v962 = vsel %vm954, %v849, 0
      %v965 = vsel %vm954, %v850, 0
      %v968 = vsel %vm954, %v851, 0
      %v971 = vsel %vm954, %v852, 0
      %v974 = vsel %vm954, %v853, 0
      %v977 = vsel %vm954, %v854, 0
      %979 = vmatpush.msra.mxu0 0.0
      %980 = vmatpush.msra.mxu0 0.0
      %981 = vmatpush.msra.mxu0 0.0
      %982 = vmatpush.msra.mxu0 0.0
      %983 = vmatpush.msra.mxu0 0.0
      %984 = vmatpush.msra.mxu0 0.0
      %985 = vmatpush.msra.mxu0 0.0
      %986 = vmatpush.msra.mxu0 0.0
      %987 = vmatpush.msra.mxu0 0.0
      %988 = vmatpush.msra.mxu0 0.0
      %989 = vmatpush.msra.mxu0 0.0
      %990 = vmatpush.msra.mxu0 0.0
      %991 = vmatpush.msra.mxu0 0.0
      %992 = vmatpush.msra.mxu0 0.0
      %993 = vmatpush.msra.mxu0 0.0
      %994 = vmatpush.msra.mxu0 %v956
      %995 = vmatmul.f32.gmra.mxu0 %v952
      %v996 = vpop.f32.mrf.mxu0
      %v997 = vadd.f32 %v948, %v996
      %998 = vdwg.mxu0
      %999 = vmatpush.msra.mxu0 0.0
      %1000 = vmatpush.msra.mxu0 0.0
      %1001 = vmatpush.msra.mxu0 0.0
      %1002 = vmatpush.msra.mxu0 0.0
      %1003 = vmatpush.msra.mxu0 0.0
      %1004 = vmatpush.msra.mxu0 0.0
      %1005 = vmatpush.msra.mxu0 0.0
      %1006 = vmatpush.msra.mxu0 0.0
      %1007 = vmatpush.msra.mxu0 0.0
      %1008 = vmatpush.msra.mxu0 0.0
      %1009 = vmatpush.msra.mxu0 0.0
      %1010 = vmatpush.msra.mxu0 0.0
      %1011 = vmatpush.msra.mxu0 0.0
      %1012 = vmatpush.msra.mxu0 0.0
      %1013 = vmatpush.msra.mxu0 0.0
      %1014 = vmatpush.msra.mxu0 %v959
      %1015 = vmatmul.f32.gmra.mxu0 %v952
      %v1016 = vpop.f32.mrf.mxu0
      %v1017 = vadd.f32 %v948, %v1016
      %1018 = vdwg.mxu0
      %1019 = vmatpush.msra.mxu0 0.0
      %1020 = vmatpush.msra.mxu0 0.0
      %1021 = vmatpush.msra.mxu0 0.0
      %1022 = vmatpush.msra.mxu0 0.0
      %1023 = vmatpush.msra.mxu0 0.0
      %1024 = vmatpush.msra.mxu0 0.0
      %1025 = vmatpush.msra.mxu0 0.0
      %1026 = vmatpush.msra.mxu0 0.0
      %1027 = vmatpush.msra.mxu0 0.0
      %1028 = vmatpush.msra.mxu0 0.0
      %1029 = vmatpush.msra.mxu0 0.0
      %1030 = vmatpush.msra.mxu0 0.0
      %1031 = vmatpush.msra.mxu0 0.0
      %1032 = vmatpush.msra.mxu0 0.0
      %1033 = vmatpush.msra.mxu0 0.0
      %1034 = vmatpush.msra.mxu0 %v962
      %1035 = vmatmul.f32.gmra.mxu0 %v952
      %v1036 = vpop.f32.mrf.mxu0
      %v1037 = vadd.f32 %v948, %v1036
      %1038 = vdwg.mxu0
      %1039 = vmatpush.msra.mxu0 0.0
      %1040 = vmatpush.msra.mxu0 0.0
      %1041 = vmatpush.msra.mxu0 0.0
      %1042 = vmatpush.msra.mxu0 0.0
      %1043 = vmatpush.msra.mxu0 0.0
      %1044 = vmatpush.msra.mxu0 0.0
      %1045 = vmatpush.msra.mxu0 0.0
      %1046 = vmatpush.msra.mxu0 0.0
      %1047 = vmatpush.msra.mxu0 0.0
      %1048 = vmatpush.msra.mxu0 0.0
      %1049 = vmatpush.msra.mxu0 0.0
      %1050 = vmatpush.msra.mxu0 0.0
      %1051 = vmatpush.msra.mxu0 0.0
      %1052 = vmatpush.msra.mxu0 0.0
      %1053 = vmatpush.msra.mxu0 0.0
      %1054 = vmatpush.msra.mxu0 %v965
      %1055 = vmatmul.f32.gmra.mxu0 %v952
      %v1056 = vpop.f32.mrf.mxu0
      %v1057 = vadd.f32 %v948, %v1056
      %1058 = vdwg.mxu0
      %1059 = vmatpush.msra.mxu0 0.0
      %1060 = vmatpush.msra.mxu0 0.0
      %1061 = vmatpush.msra.mxu0 0.0
      %1062 = vmatpush.msra.mxu0 0.0
      %1063 = vmatpush.msra.mxu0 0.0
      %1064 = vmatpush.msra.mxu0 0.0
      %1065 = vmatpush.msra.mxu0 0.0
      %1066 = vmatpush.msra.mxu0 0.0
      %1067 = vmatpush.msra.mxu0 0.0
      %1068 = vmatpush.msra.mxu0 0.0
      %1069 = vmatpush.msra.mxu0 0.0
      %1070 = vmatpush.msra.mxu0 0.0
      %1071 = vmatpush.msra.mxu0 0.0
      %1072 = vmatpush.msra.mxu0 0.0
      %1073 = vmatpush.msra.mxu0 0.0
      %1074 = vmatpush.msra.mxu0 %v968
      %1075 = vmatmul.f32.gmra.mxu0 %v952
      %v1076 = vpop.f32.mrf.mxu0
      %v1077 = vadd.f32 %v948, %v1076
      %1078 = vdwg.mxu0
      %1079 = vmatpush.msra.mxu0 0.0
      %1080 = vmatpush.msra.mxu0 0.0
      %1081 = vmatpush.msra.mxu0 0.0
      %1082 = vmatpush.msra.mxu0 0.0
      %1083 = vmatpush.msra.mxu0 0.0
      %1084 = vmatpush.msra.mxu0 0.0
      %1085 = vmatpush.msra.mxu0 0.0
      %1086 = vmatpush.msra.mxu0 0.0
      %1087 = vmatpush.msra.mxu0 0.0
      %1088 = vmatpush.msra.mxu0 0.0
      %1089 = vmatpush.msra.mxu0 0.0
      %1090 = vmatpush.msra.mxu0 0.0
      %1091 = vmatpush.msra.mxu0 0.0
      %1092 = vmatpush.msra.mxu0 0.0
      %1093 = vmatpush.msra.mxu0 0.0
      %1094 = vmatpush.msra.mxu0 %v971
      %1095 = vmatmul.f32.gmra.mxu0 %v952
      %v1096 = vpop.f32.mrf.mxu0
      %v1097 = vadd.f32 %v948, %v1096
      %1098 = vdwg.mxu0
      %1099 = vmatpush.msra.mxu0 0.0
      %1100 = vmatpush.msra.mxu0 0.0
      %1101 = vmatpush.msra.mxu0 0.0
      %1102 = vmatpush.msra.mxu0 0.0
      %1103 = vmatpush.msra.mxu0 0.0
      %1104 = vmatpush.msra.mxu0 0.0
      %1105 = vmatpush.msra.mxu0 0.0
      %1106 = vmatpush.msra.mxu0 0.0
      %1107 = vmatpush.msra.mxu0 0.0
      %1108 = vmatpush.msra.mxu0 0.0
      %1109 = vmatpush.msra.mxu0 0.0
      %1110 = vmatpush.msra.mxu0 0.0
      %1111 = vmatpush.msra.mxu0 0.0
      %1112 = vmatpush.msra.mxu0 0.0
      %1113 = vmatpush.msra.mxu0 0.0
      %1114 = vmatpush.msra.mxu0 %v974
      %1115 = vmatmul.f32.gmra.mxu0 %v952
      %v1116 = vpop.f32.mrf.mxu0
      %v1117 = vadd.f32 %v948, %v1116
      %1118 = vdwg.mxu0
      %1119 = vmatpush.msra.mxu0 0.0
      %1120 = vmatpush.msra.mxu0 0.0
      %1121 = vmatpush.msra.mxu0 0.0
      %1122 = vmatpush.msra.mxu0 0.0
      %1123 = vmatpush.msra.mxu0 0.0
      %1124 = vmatpush.msra.mxu0 0.0
      %1125 = vmatpush.msra.mxu0 0.0
      %1126 = vmatpush.msra.mxu0 0.0
      %1127 = vmatpush.msra.mxu0 0.0
      %1128 = vmatpush.msra.mxu0 0.0
      %1129 = vmatpush.msra.mxu0 0.0
      %1130 = vmatpush.msra.mxu0 0.0
      %1131 = vmatpush.msra.mxu0 0.0
      %1132 = vmatpush.msra.mxu0 0.0
      %1133 = vmatpush.msra.mxu0 0.0
      %1134 = vmatpush.msra.mxu0 %v977
      %1135 = vmatmul.f32.gmra.mxu0 %v952
      %v1136 = vpop.f32.mrf.mxu0
      %v1137 = vadd.f32 %v948, %v1136
      %1138 = vdwg.mxu0
      %v1139 = vmax.f32 %v997, 0.0
      %v1140 = vmax.f32 %v1017, 0.0
      %v1141 = vmax.f32 %v1037, 0.0
      %v1142 = vmax.f32 %v1057, 0.0
      %v1143 = vmax.f32 %v1077, 0.0
      %v1144 = vmax.f32 %v1097, 0.0
      %v1145 = vmax.f32 %v1117, 0.0
      %v1146 = vmax.f32 %v1137, 0.0
      %v1148 = vsel %vm954, %v855, 0
      %v1151 = vsel %vm954, %v856, 0
      %v1154 = vsel %vm954, %v857, 0
      %v1157 = vsel %vm954, %v858, 0
      %v1160 = vsel %vm954, %v859, 0
      %v1163 = vsel %vm954, %v860, 0
      %v1166 = vsel %vm954, %v861, 0
      %v1169 = vsel %vm954, %v862, 0
      %1171 = vmatpush.msra.mxu0 0.0
      %1172 = vmatpush.msra.mxu0 0.0
      %1173 = vmatpush.msra.mxu0 0.0
      %1174 = vmatpush.msra.mxu0 0.0
      %1175 = vmatpush.msra.mxu0 0.0
      %1176 = vmatpush.msra.mxu0 0.0
      %1177 = vmatpush.msra.mxu0 0.0
      %1178 = vmatpush.msra.mxu0 0.0
      %1179 = vmatpush.msra.mxu0 0.0
      %1180 = vmatpush.msra.mxu0 0.0
      %1181 = vmatpush.msra.mxu0 0.0
      %1182 = vmatpush.msra.mxu0 0.0
      %1183 = vmatpush.msra.mxu0 0.0
      %1184 = vmatpush.msra.mxu0 0.0
      %1185 = vmatpush.msra.mxu0 0.0
      %1186 = vmatpush.msra.mxu0 %v1148
      %1187 = vmatmul.f32.gmra.mxu0 %v952
      %v1188 = vpop.f32.mrf.mxu0
      %v1189 = vadd.f32 %v948, %v1188
      %1190 = vdwg.mxu0
      %1191 = vmatpush.msra.mxu0 0.0
      %1192 = vmatpush.msra.mxu0 0.0
      %1193 = vmatpush.msra.mxu0 0.0
      %1194 = vmatpush.msra.mxu0 0.0
      %1195 = vmatpush.msra.mxu0 0.0
      %1196 = vmatpush.msra.mxu0 0.0
      %1197 = vmatpush.msra.mxu0 0.0
      %1198 = vmatpush.msra.mxu0 0.0
      %1199 = vmatpush.msra.mxu0 0.0
      %1200 = vmatpush.msra.mxu0 0.0
      %1201 = vmatpush.msra.mxu0 0.0
      %1202 = vmatpush.msra.mxu0 0.0
      %1203 = vmatpush.msra.mxu0 0.0
      %1204 = vmatpush.msra.mxu0 0.0
      %1205 = vmatpush.msra.mxu0 0.0
      %1206 = vmatpush.msra.mxu0 %v1151
      %1207 = vmatmul.f32.gmra.mxu0 %v952
      %v1208 = vpop.f32.mrf.mxu0
      %v1209 = vadd.f32 %v948, %v1208
      %1210 = vdwg.mxu0
      %1211 = vmatpush.msra.mxu0 0.0
      %1212 = vmatpush.msra.mxu0 0.0
      %1213 = vmatpush.msra.mxu0 0.0
      %1214 = vmatpush.msra.mxu0 0.0
      %1215 = vmatpush.msra.mxu0 0.0
      %1216 = vmatpush.msra.mxu0 0.0
      %1217 = vmatpush.msra.mxu0 0.0
      %1218 = vmatpush.msra.mxu0 0.0
      %1219 = vmatpush.msra.mxu0 0.0
      %1220 = vmatpush.msra.mxu0 0.0
      %1221 = vmatpush.msra.mxu0 0.0
      %1222 = vmatpush.msra.mxu0 0.0
      %1223 = vmatpush.msra.mxu0 0.0
      %1224 = vmatpush.msra.mxu0 0.0
      %1225 = vmatpush.msra.mxu0 0.0
      %1226 = vmatpush.msra.mxu0 %v1154
      %1227 = vmatmul.f32.gmra.mxu0 %v952
      %v1228 = vpop.f32.mrf.mxu0
      %v1229 = vadd.f32 %v948, %v1228
      %1230 = vdwg.mxu0
      %1231 = vmatpush.msra.mxu0 0.0
      %1232 = vmatpush.msra.mxu0 0.0
      %1233 = vmatpush.msra.mxu0 0.0
      %1234 = vmatpush.msra.mxu0 0.0
      %1235 = vmatpush.msra.mxu0 0.0
      %1236 = vmatpush.msra.mxu0 0.0
      %1237 = vmatpush.msra.mxu0 0.0
      %1238 = vmatpush.msra.mxu0 0.0
      %1239 = vmatpush.msra.mxu0 0.0
      %1240 = vmatpush.msra.mxu0 0.0
      %1241 = vmatpush.msra.mxu0 0.0
      %1242 = vmatpush.msra.mxu0 0.0
      %1243 = vmatpush.msra.mxu0 0.0
      %1244 = vmatpush.msra.mxu0 0.0
      %1245 = vmatpush.msra.mxu0 0.0
      %1246 = vmatpush.msra.mxu0 %v1157
      %1247 = vmatmul.f32.gmra.mxu0 %v952
      %v1248 = vpop.f32.mrf.mxu0
      %v1249 = vadd.f32 %v948, %v1248
      %1250 = vdwg.mxu0
      %1251 = vmatpush.msra.mxu0 0.0
      %1252 = vmatpush.msra.mxu0 0.0
      %1253 = vmatpush.msra.mxu0 0.0
      %1254 = vmatpush.msra.mxu0 0.0
      %1255 = vmatpush.msra.mxu0 0.0
      %1256 = vmatpush.msra.mxu0 0.0
      %1257 = vmatpush.msra.mxu0 0.0
      %1258 = vmatpush.msra.mxu0 0.0
      %1259 = vmatpush.msra.mxu0 0.0
      %1260 = vmatpush.msra.mxu0 0.0
      %1261 = vmatpush.msra.mxu0 0.0
      %1262 = vmatpush.msra.mxu0 0.0
      %1263 = vmatpush.msra.mxu0 0.0
      %1264 = vmatpush.msra.mxu0 0.0
      %1265 = vmatpush.msra.mxu0 0.0
      %1266 = vmatpush.msra.mxu0 %v1160
      %1267 = vmatmul.f32.gmra.mxu0 %v952
      %v1268 = vpop.f32.mrf.mxu0
      %v1269 = vadd.f32 %v948, %v1268
      %1270 = vdwg.mxu0
      %1271 = vmatpush.msra.mxu0 0.0
      %1272 = vmatpush.msra.mxu0 0.0
      %1273 = vmatpush.msra.mxu0 0.0
      %1274 = vmatpush.msra.mxu0 0.0
      %1275 = vmatpush.msra.mxu0 0.0
      %1276 = vmatpush.msra.mxu0 0.0
      %1277 = vmatpush.msra.mxu0 0.0
      %1278 = vmatpush.msra.mxu0 0.0
      %1279 = vmatpush.msra.mxu0 0.0
      %1280 = vmatpush.msra.mxu0 0.0
      %1281 = vmatpush.msra.mxu0 0.0
      %1282 = vmatpush.msra.mxu0 0.0
      %1283 = vmatpush.msra.mxu0 0.0
      %1284 = vmatpush.msra.mxu0 0.0
      %1285 = vmatpush.msra.mxu0 0.0
      %1286 = vmatpush.msra.mxu0 %v1163
      %1287 = vmatmul.f32.gmra.mxu0 %v952
      %v1288 = vpop.f32.mrf.mxu0
      %v1289 = vadd.f32 %v948, %v1288
      %1290 = vdwg.mxu0
      %1291 = vmatpush.msra.mxu0 0.0
      %1292 = vmatpush.msra.mxu0 0.0
      %1293 = vmatpush.msra.mxu0 0.0
      %1294 = vmatpush.msra.mxu0 0.0
      %1295 = vmatpush.msra.mxu0 0.0
      %1296 = vmatpush.msra.mxu0 0.0
      %1297 = vmatpush.msra.mxu0 0.0
      %1298 = vmatpush.msra.mxu0 0.0
      %1299 = vmatpush.msra.mxu0 0.0
      %1300 = vmatpush.msra.mxu0 0.0
      %1301 = vmatpush.msra.mxu0 0.0
      %1302 = vmatpush.msra.mxu0 0.0
      %1303 = vmatpush.msra.mxu0 0.0
      %1304 = vmatpush.msra.mxu0 0.0
      %1305 = vmatpush.msra.mxu0 0.0
      %1306 = vmatpush.msra.mxu0 %v1166
      %1307 = vmatmul.f32.gmra.mxu0 %v952
      %v1308 = vpop.f32.mrf.mxu0
      %v1309 = vadd.f32 %v948, %v1308
      %1310 = vdwg.mxu0
      %1311 = vmatpush.msra.mxu0 0.0
      %1312 = vmatpush.msra.mxu0 0.0
      %1313 = vmatpush.msra.mxu0 0.0
      %1314 = vmatpush.msra.mxu0 0.0
      %1315 = vmatpush.msra.mxu0 0.0
      %1316 = vmatpush.msra.mxu0 0.0
      %1317 = vmatpush.msra.mxu0 0.0
      %1318 = vmatpush.msra.mxu0 0.0
      %1319 = vmatpush.msra.mxu0 0.0
      %1320 = vmatpush.msra.mxu0 0.0
      %1321 = vmatpush.msra.mxu0 0.0
      %1322 = vmatpush.msra.mxu0 0.0
      %1323 = vmatpush.msra.mxu0 0.0
      %1324 = vmatpush.msra.mxu0 0.0
      %1325 = vmatpush.msra.mxu0 0.0
      %1326 = vmatpush.msra.mxu0 %v1169
      %1327 = vmatmul.f32.gmra.mxu0 %v952
      %v1328 = vpop.f32.mrf.mxu0
      %v1329 = vadd.f32 %v948, %v1328
      %1330 = vdwg.mxu0
      %v1331 = vmax.f32 %v1189, 0.0
      %v1332 = vmax.f32 %v1209, 0.0
      %v1333 = vmax.f32 %v1229, 0.0
      %v1334 = vmax.f32 %v1249, 0.0
      %v1335 = vmax.f32 %v1269, 0.0
      %v1336 = vmax.f32 %v1289, 0.0
      %v1337 = vmax.f32 %v1309, 0.0
      %v1338 = vmax.f32 %v1329, 0.0
      %v1339 = vmax.f32 %v1139, %v1331
      %v1340 = vmax.f32 %v1140, %v1332
      %v1341 = vmax.f32 %v1141, %v1333
      %v1342 = vmax.f32 %v1142, %v1334
      %v1343 = vmax.f32 %v1143, %v1335
      %v1344 = vmax.f32 %v1144, %v1336
      %v1345 = vmax.f32 %v1145, %v1337
      %v1346 = vmax.f32 %v1146, %v1338
      %v1348 = vsel %vm954, %v927, 0
      %v1351 = vsel %vm954, %v928, 0
      %v1354 = vsel %vm954, %v929, 0
      %v1357 = vsel %vm954, %v930, 0
      %v1360 = vsel %vm954, %v931, 0
      %v1363 = vsel %vm954, %v932, 0
      %v1366 = vsel %vm954, %v933, 0
      %v1369 = vsel %vm954, %v934, 0
      %1371 = vmatpush.msra.mxu0 0.0
      %1372 = vmatpush.msra.mxu0 0.0
      %1373 = vmatpush.msra.mxu0 0.0
      %1374 = vmatpush.msra.mxu0 0.0
      %1375 = vmatpush.msra.mxu0 0.0
      %1376 = vmatpush.msra.mxu0 0.0
      %1377 = vmatpush.msra.mxu0 0.0
      %1378 = vmatpush.msra.mxu0 0.0
      %1379 = vmatpush.msra.mxu0 0.0
      %1380 = vmatpush.msra.mxu0 0.0
      %1381 = vmatpush.msra.mxu0 0.0
      %1382 = vmatpush.msra.mxu0 0.0
      %1383 = vmatpush.msra.mxu0 0.0
      %1384 = vmatpush.msra.mxu0 0.0
      %1385 = vmatpush.msra.mxu0 0.0
      %1386 = vmatpush.msra.mxu0 %v1348
      %1387 = vmatmul.f32.gmra.mxu0 %v952
      %v1388 = vpop.f32.mrf.mxu0
      %v1389 = vadd.f32 %v948, %v1388
      %1390 = vdwg.mxu0
      %1391 = vmatpush.msra.mxu0 0.0
      %1392 = vmatpush.msra.mxu0 0.0
      %1393 = vmatpush.msra.mxu0 0.0
      %1394 = vmatpush.msra.mxu0 0.0
      %1395 = vmatpush.msra.mxu0 0.0
      %1396 = vmatpush.msra.mxu0 0.0
      %1397 = vmatpush.msra.mxu0 0.0
      %1398 = vmatpush.msra.mxu0 0.0
      %1399 = vmatpush.msra.mxu0 0.0
      %1400 = vmatpush.msra.mxu0 0.0
      %1401 = vmatpush.msra.mxu0 0.0
      %1402 = vmatpush.msra.mxu0 0.0
      %1403 = vmatpush.msra.mxu0 0.0
      %1404 = vmatpush.msra.mxu0 0.0
      %1405 = vmatpush.msra.mxu0 0.0
      %1406 = vmatpush.msra.mxu0 %v1351
      %1407 = vmatmul.f32.gmra.mxu0 %v952
      %v1408 = vpop.f32.mrf.mxu0
      %v1409 = vadd.f32 %v948, %v1408
      %1410 = vdwg.mxu0
      %1411 = vmatpush.msra.mxu0 0.0
      %1412 = vmatpush.msra.mxu0 0.0
      %1413 = vmatpush.msra.mxu0 0.0
      %1414 = vmatpush.msra.mxu0 0.0
      %1415 = vmatpush.msra.mxu0 0.0
      %1416 = vmatpush.msra.mxu0 0.0
      %1417 = vmatpush.msra.mxu0 0.0
      %1418 = vmatpush.msra.mxu0 0.0
      %1419 = vmatpush.msra.mxu0 0.0
      %1420 = vmatpush.msra.mxu0 0.0
      %1421 = vmatpush.msra.mxu0 0.0
      %1422 = vmatpush.msra.mxu0 0.0
      %1423 = vmatpush.msra.mxu0 0.0
      %1424 = vmatpush.msra.mxu0 0.0
      %1425 = vmatpush.msra.mxu0 0.0
      %1426 = vmatpush.msra.mxu0 %v1354
      %1427 = vmatmul.f32.gmra.mxu0 %v952
      %v1428 = vpop.f32.mrf.mxu0
      %v1429 = vadd.f32 %v948, %v1428
      %1430 = vdwg.mxu0
      %1431 = vmatpush.msra.mxu0 0.0
      %1432 = vmatpush.msra.mxu0 0.0
      %1433 = vmatpush.msra.mxu0 0.0
      %1434 = vmatpush.msra.mxu0 0.0
      %1435 = vmatpush.msra.mxu0 0.0
      %1436 = vmatpush.msra.mxu0 0.0
      %1437 = vmatpush.msra.mxu0 0.0
      %1438 = vmatpush.msra.mxu0 0.0
      %1439 = vmatpush.msra.mxu0 0.0
      %1440 = vmatpush.msra.mxu0 0.0
      %1441 = vmatpush.msra.mxu0 0.0
      %1442 = vmatpush.msra.mxu0 0.0
      %1443 = vmatpush.msra.mxu0 0.0
      %1444 = vmatpush.msra.mxu0 0.0
      %1445 = vmatpush.msra.mxu0 0.0
      %1446 = vmatpush.msra.mxu0 %v1357
      %1447 = vmatmul.f32.gmra.mxu0 %v952
      %v1448 = vpop.f32.mrf.mxu0
      %v1449 = vadd.f32 %v948, %v1448
      %1450 = vdwg.mxu0
      %1451 = vmatpush.msra.mxu0 0.0
      %1452 = vmatpush.msra.mxu0 0.0
      %1453 = vmatpush.msra.mxu0 0.0
      %1454 = vmatpush.msra.mxu0 0.0
      %1455 = vmatpush.msra.mxu0 0.0
      %1456 = vmatpush.msra.mxu0 0.0
      %1457 = vmatpush.msra.mxu0 0.0
      %1458 = vmatpush.msra.mxu0 0.0
      %1459 = vmatpush.msra.mxu0 0.0
      %1460 = vmatpush.msra.mxu0 0.0
      %1461 = vmatpush.msra.mxu0 0.0
      %1462 = vmatpush.msra.mxu0 0.0
      %1463 = vmatpush.msra.mxu0 0.0
      %1464 = vmatpush.msra.mxu0 0.0
      %1465 = vmatpush.msra.mxu0 0.0
      %1466 = vmatpush.msra.mxu0 %v1360
      %1467 = vmatmul.f32.gmra.mxu0 %v952
      %v1468 = vpop.f32.mrf.mxu0
      %v1469 = vadd.f32 %v948, %v1468
      %1470 = vdwg.mxu0
      %1471 = vmatpush.msra.mxu0 0.0
      %1472 = vmatpush.msra.mxu0 0.0
      %1473 = vmatpush.msra.mxu0 0.0
      %1474 = vmatpush.msra.mxu0 0.0
      %1475 = vmatpush.msra.mxu0 0.0
      %1476 = vmatpush.msra.mxu0 0.0
      %1477 = vmatpush.msra.mxu0 0.0
      %1478 = vmatpush.msra.mxu0 0.0
      %1479 = vmatpush.msra.mxu0 0.0
      %1480 = vmatpush.msra.mxu0 0.0
      %1481 = vmatpush.msra.mxu0 0.0
      %1482 = vmatpush.msra.mxu0 0.0
      %1483 = vmatpush.msra.mxu0 0.0
      %1484 = vmatpush.msra.mxu0 0.0
      %1485 = vmatpush.msra.mxu0 0.0
      %1486 = vmatpush.msra.mxu0 %v1363
      %1487 = vmatmul.f32.gmra.mxu0 %v952
      %v1488 = vpop.f32.mrf.mxu0
      %v1489 = vadd.f32 %v948, %v1488
      %1490 = vdwg.mxu0
      %1491 = vmatpush.msra.mxu0 0.0
      %1492 = vmatpush.msra.mxu0 0.0
      %1493 = vmatpush.msra.mxu0 0.0
      %1494 = vmatpush.msra.mxu0 0.0
      %1495 = vmatpush.msra.mxu0 0.0
      %1496 = vmatpush.msra.mxu0 0.0
      %1497 = vmatpush.msra.mxu0 0.0
      %1498 = vmatpush.msra.mxu0 0.0
      %1499 = vmatpush.msra.mxu0 0.0
      %1500 = vmatpush.msra.mxu0 0.0
      %1501 = vmatpush.msra.mxu0 0.0
      %1502 = vmatpush.msra.mxu0 0.0
      %1503 = vmatpush.msra.mxu0 0.0
      %1504 = vmatpush.msra.mxu0 0.0
      %1505 = vmatpush.msra.mxu0 0.0
      %1506 = vmatpush.msra.mxu0 %v1366
      %1507 = vmatmul.f32.gmra.mxu0 %v952
      %v1508 = vpop.f32.mrf.mxu0
      %v1509 = vadd.f32 %v948, %v1508
      %1510 = vdwg.mxu0
      %1511 = vmatpush.msra.mxu0 0.0
      %1512 = vmatpush.msra.mxu0 0.0
      %1513 = vmatpush.msra.mxu0 0.0
      %1514 = vmatpush.msra.mxu0 0.0
      %1515 = vmatpush.msra.mxu0 0.0
      %1516 = vmatpush.msra.mxu0 0.0
      %1517 = vmatpush.msra.mxu0 0.0
      %1518 = vmatpush.msra.mxu0 0.0
      %1519 = vmatpush.msra.mxu0 0.0
      %1520 = vmatpush.msra.mxu0 0.0
      %1521 = vmatpush.msra.mxu0 0.0
      %1522 = vmatpush.msra.mxu0 0.0
      %1523 = vmatpush.msra.mxu0 0.0
      %1524 = vmatpush.msra.mxu0 0.0
      %1525 = vmatpush.msra.mxu0 0.0
      %1526 = vmatpush.msra.mxu0 %v1369
      %1527 = vmatmul.f32.gmra.mxu0 %v952
      %v1528 = vpop.f32.mrf.mxu0
      %v1529 = vadd.f32 %v948, %v1528
      %1530 = vdwg.mxu0
      %v1531 = vmax.f32 %v1389, 0.0
      %v1532 = vmax.f32 %v1409, 0.0
      %v1533 = vmax.f32 %v1429, 0.0
      %v1534 = vmax.f32 %v1449, 0.0
      %v1535 = vmax.f32 %v1469, 0.0
      %v1536 = vmax.f32 %v1489, 0.0
      %v1537 = vmax.f32 %v1509, 0.0
      %v1538 = vmax.f32 %v1529, 0.0
      %v1540 = vsel %vm954, %v935, 0
      %v1543 = vsel %vm954, %v936, 0
      %v1546 = vsel %vm954, %v937, 0
      %v1549 = vsel %vm954, %v938, 0
      %v1552 = vsel %vm954, %v939, 0
      %v1555 = vsel %vm954, %v940, 0
      %v1558 = vsel %vm954, %v941, 0
      %v1561 = vsel %vm954, %v942, 0
      %1563 = vmatpush.msra.mxu0 0.0
      %1564 = vmatpush.msra.mxu0 0.0
      %1565 = vmatpush.msra.mxu0 0.0
      %1566 = vmatpush.msra.mxu0 0.0
      %1567 = vmatpush.msra.mxu0 0.0
      %1568 = vmatpush.msra.mxu0 0.0
      %1569 = vmatpush.msra.mxu0 0.0
      %1570 = vmatpush.msra.mxu0 0.0
      %1571 = vmatpush.msra.mxu0 0.0
      %1572 = vmatpush.msra.mxu0 0.0
      %1573 = vmatpush.msra.mxu0 0.0
      %1574 = vmatpush.msra.mxu0 0.0
      %1575 = vmatpush.msra.mxu0 0.0
      %1576 = vmatpush.msra.mxu0 0.0
      %1577 = vmatpush.msra.mxu0 0.0
      %1578 = vmatpush.msra.mxu0 %v1540
      %1579 = vmatmul.f32.gmra.mxu0 %v952
      %v1580 = vpop.f32.mrf.mxu0
      %v1581 = vadd.f32 %v948, %v1580
      %1582 = vdwg.mxu0
      %1583 = vmatpush.msra.mxu0 0.0
      %1584 = vmatpush.msra.mxu0 0.0
      %1585 = vmatpush.msra.mxu0 0.0
      %1586 = vmatpush.msra.mxu0 0.0
      %1587 = vmatpush.msra.mxu0 0.0
      %1588 = vmatpush.msra.mxu0 0.0
      %1589 = vmatpush.msra.mxu0 0.0
      %1590 = vmatpush.msra.mxu0 0.0
      %1591 = vmatpush.msra.mxu0 0.0
      %1592 = vmatpush.msra.mxu0 0.0
      %1593 = vmatpush.msra.mxu0 0.0
      %1594 = vmatpush.msra.mxu0 0.0
      %1595 = vmatpush.msra.mxu0 0.0
      %1596 = vmatpush.msra.mxu0 0.0
      %1597 = vmatpush.msra.mxu0 0.0
      %1598 = vmatpush.msra.mxu0 %v1543
      %1599 = vmatmul.f32.gmra.mxu0 %v952
      %v1600 = vpop.f32.mrf.mxu0
      %v1601 = vadd.f32 %v948, %v1600
      %1602 = vdwg.mxu0
      %1603 = vmatpush.msra.mxu0 0.0
      %1604 = vmatpush.msra.mxu0 0.0
      %1605 = vmatpush.msra.mxu0 0.0
      %1606 = vmatpush.msra.mxu0 0.0
      %1607 = vmatpush.msra.mxu0 0.0
      %1608 = vmatpush.msra.mxu0 0.0
      %1609 = vmatpush.msra.mxu0 0.0
      %1610 = vmatpush.msra.mxu0 0.0
      %1611 = vmatpush.msra.mxu0 0.0
      %1612 = vmatpush.msra.mxu0 0.0
      %1613 = vmatpush.msra.mxu0 0.0
      %1614 = vmatpush.msra.mxu0 0.0
      %1615 = vmatpush.msra.mxu0 0.0
      %1616 = vmatpush.msra.mxu0 0.0
      %1617 = vmatpush.msra.mxu0 0.0
      %1618 = vmatpush.msra.mxu0 %v1546
      %1619 = vmatmul.f32.gmra.mxu0 %v952
      %v1620 = vpop.f32.mrf.mxu0
      %v1621 = vadd.f32 %v948, %v1620
      %1622 = vdwg.mxu0
      %1623 = vmatpush.msra.mxu0 0.0
      %1624 = vmatpush.msra.mxu0 0.0
      %1625 = vmatpush.msra.mxu0 0.0
      %1626 = vmatpush.msra.mxu0 0.0
      %1627 = vmatpush.msra.mxu0 0.0
      %1628 = vmatpush.msra.mxu0 0.0
      %1629 = vmatpush.msra.mxu0 0.0
      %1630 = vmatpush.msra.mxu0 0.0
      %1631 = vmatpush.msra.mxu0 0.0
      %1632 = vmatpush.msra.mxu0 0.0
      %1633 = vmatpush.msra.mxu0 0.0
      %1634 = vmatpush.msra.mxu0 0.0
      %1635 = vmatpush.msra.mxu0 0.0
      %1636 = vmatpush.msra.mxu0 0.0
      %1637 = vmatpush.msra.mxu0 0.0
      %1638 = vmatpush.msra.mxu0 %v1549
      %1639 = vmatmul.f32.gmra.mxu0 %v952
      %v1640 = vpop.f32.mrf.mxu0
      %v1641 = vadd.f32 %v948, %v1640
      %1642 = vdwg.mxu0
      %1643 = vmatpush.msra.mxu0 0.0
      %1644 = vmatpush.msra.mxu0 0.0
      %1645 = vmatpush.msra.mxu0 0.0
      %1646 = vmatpush.msra.mxu0 0.0
      %1647 = vmatpush.msra.mxu0 0.0
      %1648 = vmatpush.msra.mxu0 0.0
      %1649 = vmatpush.msra.mxu0 0.0
      %1650 = vmatpush.msra.mxu0 0.0
      %1651 = vmatpush.msra.mxu0 0.0
      %1652 = vmatpush.msra.mxu0 0.0
      %1653 = vmatpush.msra.mxu0 0.0
      %1654 = vmatpush.msra.mxu0 0.0
      %1655 = vmatpush.msra.mxu0 0.0
      %1656 = vmatpush.msra.mxu0 0.0
      %1657 = vmatpush.msra.mxu0 0.0
      %1658 = vmatpush.msra.mxu0 %v1552
      %1659 = vmatmul.f32.gmra.mxu0 %v952
      %v1660 = vpop.f32.mrf.mxu0
      %v1661 = vadd.f32 %v948, %v1660
      %1662 = vdwg.mxu0
      %1663 = vmatpush.msra.mxu0 0.0
      %1664 = vmatpush.msra.mxu0 0.0
      %1665 = vmatpush.msra.mxu0 0.0
      %1666 = vmatpush.msra.mxu0 0.0
      %1667 = vmatpush.msra.mxu0 0.0
      %1668 = vmatpush.msra.mxu0 0.0
      %1669 = vmatpush.msra.mxu0 0.0
      %1670 = vmatpush.msra.mxu0 0.0
      %1671 = vmatpush.msra.mxu0 0.0
      %1672 = vmatpush.msra.mxu0 0.0
      %1673 = vmatpush.msra.mxu0 0.0
      %1674 = vmatpush.msra.mxu0 0.0
      %1675 = vmatpush.msra.mxu0 0.0
      %1676 = vmatpush.msra.mxu0 0.0
      %1677 = vmatpush.msra.mxu0 0.0
      %1678 = vmatpush.msra.mxu0 %v1555
      %1679 = vmatmul.f32.gmra.mxu0 %v952
      %v1680 = vpop.f32.mrf.mxu0
      %v1681 = vadd.f32 %v948, %v1680
      %1682 = vdwg.mxu0
      %1683 = vmatpush.msra.mxu0 0.0
      %1684 = vmatpush.msra.mxu0 0.0
      %1685 = vmatpush.msra.mxu0 0.0
      %1686 = vmatpush.msra.mxu0 0.0
      %1687 = vmatpush.msra.mxu0 0.0
      %1688 = vmatpush.msra.mxu0 0.0
      %1689 = vmatpush.msra.mxu0 0.0
      %1690 = vmatpush.msra.mxu0 0.0
      %1691 = vmatpush.msra.mxu0 0.0
      %1692 = vmatpush.msra.mxu0 0.0
      %1693 = vmatpush.msra.mxu0 0.0
      %1694 = vmatpush.msra.mxu0 0.0
      %1695 = vmatpush.msra.mxu0 0.0
      %1696 = vmatpush.msra.mxu0 0.0
      %1697 = vmatpush.msra.mxu0 0.0
      %1698 = vmatpush.msra.mxu0 %v1558
      %1699 = vmatmul.f32.gmra.mxu0 %v952
      %v1700 = vpop.f32.mrf.mxu0
      %v1701 = vadd.f32 %v948, %v1700
      %1702 = vdwg.mxu0
      %1703 = vmatpush.msra.mxu0 0.0
      %1704 = vmatpush.msra.mxu0 0.0
      %1705 = vmatpush.msra.mxu0 0.0
      %1706 = vmatpush.msra.mxu0 0.0
      %1707 = vmatpush.msra.mxu0 0.0
      %1708 = vmatpush.msra.mxu0 0.0
      %1709 = vmatpush.msra.mxu0 0.0
      %1710 = vmatpush.msra.mxu0 0.0
      %1711 = vmatpush.msra.mxu0 0.0
      %1712 = vmatpush.msra.mxu0 0.0
      %1713 = vmatpush.msra.mxu0 0.0
      %1714 = vmatpush.msra.mxu0 0.0
      %1715 = vmatpush.msra.mxu0 0.0
      %1716 = vmatpush.msra.mxu0 0.0
      %1717 = vmatpush.msra.mxu0 0.0
      %1718 = vmatpush.msra.mxu0 %v1561
      %1719 = vmatmul.f32.gmra.mxu0 %v952
      %v1720 = vpop.f32.mrf.mxu0
      %v1721 = vadd.f32 %v948, %v1720
      %1722 = vdwg.mxu0
      %v1723 = vmax.f32 %v1581, 0.0
      %v1724 = vmax.f32 %v1601, 0.0
      %v1725 = vmax.f32 %v1621, 0.0
      %v1726 = vmax.f32 %v1641, 0.0
      %v1727 = vmax.f32 %v1661, 0.0
      %v1728 = vmax.f32 %v1681, 0.0
      %v1729 = vmax.f32 %v1701, 0.0
      %v1730 = vmax.f32 %v1721, 0.0
      %v1731 = vmax.f32 %v1531, %v1723
      %v1732 = vmax.f32 %v1532, %v1724
      %v1733 = vmax.f32 %v1533, %v1725
      %v1734 = vmax.f32 %v1534, %v1726
      %v1735 = vmax.f32 %v1535, %v1727
      %v1736 = vmax.f32 %v1536, %v1728
      %v1737 = vmax.f32 %v1537, %v1729
      %v1738 = vmax.f32 %v1538, %v1730
      %v1739 = vmax.f32 %v1339, %v1731
      %v1740 = vmax.f32 %v1340, %v1732
      %v1741 = vmax.f32 %v1341, %v1733
      %v1742 = vmax.f32 %v1342, %v1734
      %v1743 = vmax.f32 %v1343, %v1735
      %v1744 = vmax.f32 %v1344, %v1736
      %v1745 = vmax.f32 %v1345, %v1737
      %v1746 = vmax.f32 %v1346, %v1738
      %v1747 = vld [vmem:[%s5] sm:$0x7f]
      %v1748 = vld [vmem:[%s6] sm:$0x7f]
      %1750 = vset.pattern.permute.xlu0 0
      %1751 = vperm.xlu0 %1750, %v1748
      %v1752 = vpop.permute.xlu0 %1751
      %vm1754 = vcmask 15360
      %v1756 = vsel %vm1754, %v1747, 0
      %vm1758 = vcmask 1041408
      %v1760 = vsel %vm1758, %v1739, 0
      %v1763 = vsel %vm1758, %v1740, 0
      %v1766 = vsel %vm1758, %v1741, 0
      %v1769 = vsel %vm1758, %v1742, 0
      %v1772 = vsel %vm1758, %v1743, 0
      %v1775 = vsel %vm1758, %v1744, 0
      %v1778 = vsel %vm1758, %v1745, 0
      %v1781 = vsel %vm1758, %v1746, 0
      %1783 = vmatpush.msra.mxu0 0.0
      %1784 = vmatpush.msra.mxu0 0.0
      %1785 = vmatpush.msra.mxu0 0.0
      %1786 = vmatpush.msra.mxu0 0.0
      %1787 = vmatpush.msra.mxu0 0.0
      %1788 = vmatpush.msra.mxu0 0.0
      %1789 = vmatpush.msra.mxu0 0.0
      %1790 = vmatpush.msra.mxu0 0.0
      %1791 = vmatpush.msra.mxu0 0.0
      %1792 = vmatpush.msra.mxu0 0.0
      %1793 = vmatpush.msra.mxu0 0.0
      %1794 = vmatpush.msra.mxu0 0.0
      %1795 = vmatpush.msra.mxu0 0.0
      %1796 = vmatpush.msra.mxu0 0.0
      %1797 = vmatpush.msra.mxu0 0.0
      %1798 = vmatpush.msra.mxu0 %v1760
      %1799 = vmatmul.f32.gmra.mxu0 %v1756
      %v1800 = vpop.f32.mrf.mxu0
      %v1801 = vadd.f32 %v1752, %v1800
      %1802 = vdwg.mxu0
      %1803 = vmatpush.msra.mxu0 0.0
      %1804 = vmatpush.msra.mxu0 0.0
      %1805 = vmatpush.msra.mxu0 0.0
      %1806 = vmatpush.msra.mxu0 0.0
      %1807 = vmatpush.msra.mxu0 0.0
      %1808 = vmatpush.msra.mxu0 0.0
      %1809 = vmatpush.msra.mxu0 0.0
      %1810 = vmatpush.msra.mxu0 0.0
      %1811 = vmatpush.msra.mxu0 0.0
      %1812 = vmatpush.msra.mxu0 0.0
      %1813 = vmatpush.msra.mxu0 0.0
      %1814 = vmatpush.msra.mxu0 0.0
      %1815 = vmatpush.msra.mxu0 0.0
      %1816 = vmatpush.msra.mxu0 0.0
      %1817 = vmatpush.msra.mxu0 0.0
      %1818 = vmatpush.msra.mxu0 %v1763
      %1819 = vmatmul.f32.gmra.mxu0 %v1756
      %v1820 = vpop.f32.mrf.mxu0
      %v1821 = vadd.f32 %v1752, %v1820
      %1822 = vdwg.mxu0
      %1823 = vmatpush.msra.mxu0 0.0
      %1824 = vmatpush.msra.mxu0 0.0
      %1825 = vmatpush.msra.mxu0 0.0
      %1826 = vmatpush.msra.mxu0 0.0
      %1827 = vmatpush.msra.mxu0 0.0
      %1828 = vmatpush.msra.mxu0 0.0
      %1829 = vmatpush.msra.mxu0 0.0
      %1830 = vmatpush.msra.mxu0 0.0
      %1831 = vmatpush.msra.mxu0 0.0
      %1832 = vmatpush.msra.mxu0 0.0
      %1833 = vmatpush.msra.mxu0 0.0
      %1834 = vmatpush.msra.mxu0 0.0
      %1835 = vmatpush.msra.mxu0 0.0
      %1836 = vmatpush.msra.mxu0 0.0
      %1837 = vmatpush.msra.mxu0 0.0
      %1838 = vmatpush.msra.mxu0 %v1766
      %1839 = vmatmul.f32.gmra.mxu0 %v1756
      %v1840 = vpop.f32.mrf.mxu0
      %v1841 = vadd.f32 %v1752, %v1840
      %1842 = vdwg.mxu0
      %1843 = vmatpush.msra.mxu0 0.0
      %1844 = vmatpush.msra.mxu0 0.0
      %1845 = vmatpush.msra.mxu0 0.0
      %1846 = vmatpush.msra.mxu0 0.0
      %1847 = vmatpush.msra.mxu0 0.0
      %1848 = vmatpush.msra.mxu0 0.0
      %1849 = vmatpush.msra.mxu0 0.0
      %1850 = vmatpush.msra.mxu0 0.0
      %1851 = vmatpush.msra.mxu0 0.0
      %1852 = vmatpush.msra.mxu0 0.0
      %1853 = vmatpush.msra.mxu0 0.0
      %1854 = vmatpush.msra.mxu0 0.0
      %1855 = vmatpush.msra.mxu0 0.0
      %1856 = vmatpush.msra.mxu0 0.0
      %1857 = vmatpush.msra.mxu0 0.0
      %1858 = vmatpush.msra.mxu0 %v1769
      %1859 = vmatmul.f32.gmra.mxu0 %v1756
      %v1860 = vpop.f32.mrf.mxu0
      %v1861 = vadd.f32 %v1752, %v1860
      %1862 = vdwg.mxu0
      %1863 = vmatpush.msra.mxu0 0.0
      %1864 = vmatpush.msra.mxu0 0.0
      %1865 = vmatpush.msra.mxu0 0.0
      %1866 = vmatpush.msra.mxu0 0.0
      %1867 = vmatpush.msra.mxu0 0.0
      %1868 = vmatpush.msra.mxu0 0.0
      %1869 = vmatpush.msra.mxu0 0.0
      %1870 = vmatpush.msra.mxu0 0.0
      %1871 = vmatpush.msra.mxu0 0.0
      %1872 = vmatpush.msra.mxu0 0.0
      %1873 = vmatpush.msra.mxu0 0.0
      %1874 = vmatpush.msra.mxu0 0.0
      %1875 = vmatpush.msra.mxu0 0.0
      %1876 = vmatpush.msra.mxu0 0.0
      %1877 = vmatpush.msra.mxu0 0.0
      %1878 = vmatpush.msra.mxu0 %v1772
      %1879 = vmatmul.f32.gmra.mxu0 %v1756
      %v1880 = vpop.f32.mrf.mxu0
      %v1881 = vadd.f32 %v1752, %v1880
      %1882 = vdwg.mxu0
      %1883 = vmatpush.msra.mxu0 0.0
      %1884 = vmatpush.msra.mxu0 0.0
      %1885 = vmatpush.msra.mxu0 0.0
      %1886 = vmatpush.msra.mxu0 0.0
      %1887 = vmatpush.msra.mxu0 0.0
      %1888 = vmatpush.msra.mxu0 0.0
      %1889 = vmatpush.msra.mxu0 0.0
      %1890 = vmatpush.msra.mxu0 0.0
      %1891 = vmatpush.msra.mxu0 0.0
      %1892 = vmatpush.msra.mxu0 0.0
      %1893 = vmatpush.msra.mxu0 0.0
      %1894 = vmatpush.msra.mxu0 0.0
      %1895 = vmatpush.msra.mxu0 0.0
      %1896 = vmatpush.msra.mxu0 0.0
      %1897 = vmatpush.msra.mxu0 0.0
      %1898 = vmatpush.msra.mxu0 %v1775
      %1899 = vmatmul.f32.gmra.mxu0 %v1756
      %v1900 = vpop.f32.mrf.mxu0
      %v1901 = vadd.f32 %v1752, %v1900
      %1902 = vdwg.mxu0
      %1903 = vmatpush.msra.mxu0 0.0
      %1904 = vmatpush.msra.mxu0 0.0
      %1905 = vmatpush.msra.mxu0 0.0
      %1906 = vmatpush.msra.mxu0 0.0
      %1907 = vmatpush.msra.mxu0 0.0
      %1908 = vmatpush.msra.mxu0 0.0
      %1909 = vmatpush.msra.mxu0 0.0
      %1910 = vmatpush.msra.mxu0 0.0
      %1911 = vmatpush.msra.mxu0 0.0
      %1912 = vmatpush.msra.mxu0 0.0
      %1913 = vmatpush.msra.mxu0 0.0
      %1914 = vmatpush.msra.mxu0 0.0
      %1915 = vmatpush.msra.mxu0 0.0
      %1916 = vmatpush.msra.mxu0 0.0
      %1917 = vmatpush.msra.mxu0 0.0
      %1918 = vmatpush.msra.mxu0 %v1778
      %1919 = vmatmul.f32.gmra.mxu0 %v1756
      %v1920 = vpop.f32.mrf.mxu0
      %v1921 = vadd.f32 %v1752, %v1920
      %1922 = vdwg.mxu0
      %1923 = vmatpush.msra.mxu0 0.0
      %1924 = vmatpush.msra.mxu0 0.0
      %1925 = vmatpush.msra.mxu0 0.0
      %1926 = vmatpush.msra.mxu0 0.0
      %1927 = vmatpush.msra.mxu0 0.0
      %1928 = vmatpush.msra.mxu0 0.0
      %1929 = vmatpush.msra.mxu0 0.0
      %1930 = vmatpush.msra.mxu0 0.0
      %1931 = vmatpush.msra.mxu0 0.0
      %1932 = vmatpush.msra.mxu0 0.0
      %1933 = vmatpush.msra.mxu0 0.0
      %1934 = vmatpush.msra.mxu0 0.0
      %1935 = vmatpush.msra.mxu0 0.0
      %1936 = vmatpush.msra.mxu0 0.0
      %1937 = vmatpush.msra.mxu0 0.0
      %1938 = vmatpush.msra.mxu0 %v1781
      %1939 = vmatmul.f32.gmra.mxu0 %v1756
      %v1940 = vpop.f32.mrf.mxu0
      %v1941 = vadd.f32 %v1752, %v1940
      %1942 = vdwg.mxu0
      %v1943 = vmax.f32 %v1801, 0.0
      %v1944 = vmax.f32 %v1821, 0.0
      %v1945 = vmax.f32 %v1841, 0.0
      %v1946 = vmax.f32 %v1861, 0.0
      %v1947 = vmax.f32 %v1881, 0.0
      %v1948 = vmax.f32 %v1901, 0.0
      %v1949 = vmax.f32 %v1921, 0.0
      %v1950 = vmax.f32 %v1941, 0.0
      %v1951 = vld [vmem:[%s7] sm:$0xff]
      %v1952 = vld [vmem:[%s7 + $0x8] sm:$0x3f]
      %v1953 = vld [vmem:[%s8] sm:$0xff]
      %v1954 = vld [vmem:[%s8 + $0x8] sm:$0x3f]
      %1956 = vset.pattern.permute.xlu0 0
      %1957 = vperm.xlu0 %1956, %v1953
      %v1958 = vpop.permute.xlu0 %1957
      %1961 = vset.pattern.permute.xlu0 0
      %1962 = vperm.xlu0 %1961, %v1954
      %v1963 = vpop.permute.xlu0 %1962
      %v1966 = vsel %vm950, %v1951, 0
      %v1969 = vsel %vm950, %v1952, 0
      %v1972 = vsel %vm954, %v1943, 0
      %v1975 = vsel %vm954, %v1944, 0
      %v1978 = vsel %vm954, %v1945, 0
      %v1981 = vsel %vm954, %v1946, 0
      %v1984 = vsel %vm954, %v1947, 0
      %v1987 = vsel %vm954, %v1948, 0
      %v1990 = vsel %vm954, %v1949, 0
      %v1993 = vsel %vm954, %v1950, 0
      %1995 = vmatpush.msra.mxu0 0.0
      %1996 = vmatpush.msra.mxu0 0.0
      %1997 = vmatpush.msra.mxu0 0.0
      %1998 = vmatpush.msra.mxu0 0.0
      %1999 = vmatpush.msra.mxu0 0.0
      %2000 = vmatpush.msra.mxu0 0.0
      %2001 = vmatpush.msra.mxu0 0.0
      %2002 = vmatpush.msra.mxu0 0.0
      %2003 = vmatpush.msra.mxu0 0.0
      %2004 = vmatpush.msra.mxu0 0.0
      %2005 = vmatpush.msra.mxu0 0.0
      %2006 = vmatpush.msra.mxu0 0.0
      %2007 = vmatpush.msra.mxu0 0.0
      %2008 = vmatpush.msra.mxu0 0.0
      %2009 = vmatpush.msra.mxu0 0.0
      %2010 = vmatpush.msra.mxu0 %v1972
      %2011 = vmatmul.f32.gmra.mxu0 %v1966
      %v2012 = vpop.f32.mrf.mxu0
      %v2013 = vadd.f32 %v1958, %v2012
      %2014 = vmatmul.f32.gmra.mxu0 %v1969
      %v2015 = vpop.f32.mrf.mxu0
      %v2016 = vadd.f32 %v1963, %v2015
      %2017 = vdwg.mxu0
      %2018 = vmatpush.msra.mxu0 0.0
      %2019 = vmatpush.msra.mxu0 0.0
      %2020 = vmatpush.msra.mxu0 0.0
      %2021 = vmatpush.msra.mxu0 0.0
      %2022 = vmatpush.msra.mxu0 0.0
      %2023 = vmatpush.msra.mxu0 0.0
      %2024 = vmatpush.msra.mxu0 0.0
      %2025 = vmatpush.msra.mxu0 0.0
      %2026 = vmatpush.msra.mxu0 0.0
      %2027 = vmatpush.msra.mxu0 0.0
      %2028 = vmatpush.msra.mxu0 0.0
      %2029 = vmatpush.msra.mxu0 0.0
      %2030 = vmatpush.msra.mxu0 0.0
      %2031 = vmatpush.msra.mxu0 0.0
      %2032 = vmatpush.msra.mxu0 0.0
      %2033 = vmatpush.msra.mxu0 %v1975
      %2034 = vmatmul.f32.gmra.mxu0 %v1966
      %v2035 = vpop.f32.mrf.mxu0
      %v2036 = vadd.f32 %v1958, %v2035
      %2037 = vmatmul.f32.gmra.mxu0 %v1969
      %v2038 = vpop.f32.mrf.mxu0
      %v2039 = vadd.f32 %v1963, %v2038
      %2040 = vdwg.mxu0
      %2041 = vmatpush.msra.mxu0 0.0
      %2042 = vmatpush.msra.mxu0 0.0
      %2043 = vmatpush.msra.mxu0 0.0
      %2044 = vmatpush.msra.mxu0 0.0
      %2045 = vmatpush.msra.mxu0 0.0
      %2046 = vmatpush.msra.mxu0 0.0
      %2047 = vmatpush.msra.mxu0 0.0
      %2048 = vmatpush.msra.mxu0 0.0
      %2049 = vmatpush.msra.mxu0 0.0
      %2050 = vmatpush.msra.mxu0 0.0
      %2051 = vmatpush.msra.mxu0 0.0
      %2052 = vmatpush.msra.mxu0 0.0
      %2053 = vmatpush.msra.mxu0 0.0
      %2054 = vmatpush.msra.mxu0 0.0
      %2055 = vmatpush.msra.mxu0 0.0
      %2056 = vmatpush.msra.mxu0 %v1978
      %2057 = vmatmul.f32.gmra.mxu0 %v1966
      %v2058 = vpop.f32.mrf.mxu0
      %v2059 = vadd.f32 %v1958, %v2058
      %2060 = vmatmul.f32.gmra.mxu0 %v1969
      %v2061 = vpop.f32.mrf.mxu0
      %v2062 = vadd.f32 %v1963, %v2061
      %2063 = vdwg.mxu0
      %2064 = vmatpush.msra.mxu0 0.0
      %2065 = vmatpush.msra.mxu0 0.0
      %2066 = vmatpush.msra.mxu0 0.0
      %2067 = vmatpush.msra.mxu0 0.0
      %2068 = vmatpush.msra.mxu0 0.0
      %2069 = vmatpush.msra.mxu0 0.0
      %2070 = vmatpush.msra.mxu0 0.0
      %2071 = vmatpush.msra.mxu0 0.0
      %2072 = vmatpush.msra.mxu0 0.0
      %2073 = vmatpush.msra.mxu0 0.0
      %2074 = vmatpush.msra.mxu0 0.0
      %2075 = vmatpush.msra.mxu0 0.0
      %2076 = vmatpush.msra.mxu0 0.0
      %2077 = vmatpush.msra.mxu0 0.0
      %2078 = vmatpush.msra.mxu0 0.0
      %2079 = vmatpush.msra.mxu0 %v1981
      %2080 = vmatmul.f32.gmra.mxu0 %v1966
      %v2081 = vpop.f32.mrf.mxu0
      %v2082 = vadd.f32 %v1958, %v2081
      %2083 = vmatmul.f32.gmra.mxu0 %v1969
      %v2084 = vpop.f32.mrf.mxu0
      %v2085 = vadd.f32 %v1963, %v2084
      %2086 = vdwg.mxu0
      %2087 = vmatpush.msra.mxu0 0.0
      %2088 = vmatpush.msra.mxu0 0.0
      %2089 = vmatpush.msra.mxu0 0.0
      %2090 = vmatpush.msra.mxu0 0.0
      %2091 = vmatpush.msra.mxu0 0.0
      %2092 = vmatpush.msra.mxu0 0.0
      %2093 = vmatpush.msra.mxu0 0.0
      %2094 = vmatpush.msra.mxu0 0.0
      %2095 = vmatpush.msra.mxu0 0.0
      %2096 = vmatpush.msra.mxu0 0.0
      %2097 = vmatpush.msra.mxu0 0.0
      %2098 = vmatpush.msra.mxu0 0.0
      %2099 = vmatpush.msra.mxu0 0.0
      %2100 = vmatpush.msra.mxu0 0.0
      %2101 = vmatpush.msra.mxu0 0.0
      %2102 = vmatpush.msra.mxu0 %v1984
      %2103 = vmatmul.f32.gmra.mxu0 %v1966
      %v2104 = vpop.f32.mrf.mxu0
      %v2105 = vadd.f32 %v1958, %v2104
      %2106 = vmatmul.f32.gmra.mxu0 %v1969
      %v2107 = vpop.f32.mrf.mxu0
      %v2108 = vadd.f32 %v1963, %v2107
      %2109 = vdwg.mxu0
      %2110 = vmatpush.msra.mxu0 0.0
      %2111 = vmatpush.msra.mxu0 0.0
      %2112 = vmatpush.msra.mxu0 0.0
      %2113 = vmatpush.msra.mxu0 0.0
      %2114 = vmatpush.msra.mxu0 0.0
      %2115 = vmatpush.msra.mxu0 0.0
      %2116 = vmatpush.msra.mxu0 0.0
      %2117 = vmatpush.msra.mxu0 0.0
      %2118 = vmatpush.msra.mxu0 0.0
      %2119 = vmatpush.msra.mxu0 0.0
      %2120 = vmatpush.msra.mxu0 0.0
      %2121 = vmatpush.msra.mxu0 0.0
      %2122 = vmatpush.msra.mxu0 0.0
      %2123 = vmatpush.msra.mxu0 0.0
      %2124 = vmatpush.msra.mxu0 0.0
      %2125 = vmatpush.msra.mxu0 %v1987
      %2126 = vmatmul.f32.gmra.mxu0 %v1966
      %v2127 = vpop.f32.mrf.mxu0
      %v2128 = vadd.f32 %v1958, %v2127
      %2129 = vmatmul.f32.gmra.mxu0 %v1969
      %v2130 = vpop.f32.mrf.mxu0
      %v2131 = vadd.f32 %v1963, %v2130
      %2132 = vdwg.mxu0
      %2133 = vmatpush.msra.mxu0 0.0
      %2134 = vmatpush.msra.mxu0 0.0
      %2135 = vmatpush.msra.mxu0 0.0
      %2136 = vmatpush.msra.mxu0 0.0
      %2137 = vmatpush.msra.mxu0 0.0
      %2138 = vmatpush.msra.mxu0 0.0
      %2139 = vmatpush.msra.mxu0 0.0
      %2140 = vmatpush.msra.mxu0 0.0
      %2141 = vmatpush.msra.mxu0 0.0
      %2142 = vmatpush.msra.mxu0 0.0
      %2143 = vmatpush.msra.mxu0 0.0
      %2144 = vmatpush.msra.mxu0 0.0
      %2145 = vmatpush.msra.mxu0 0.0
      %2146 = vmatpush.msra.mxu0 0.0
      %2147 = vmatpush.msra.mxu0 0.0
      %2148 = vmatpush.msra.mxu0 %v1990
      %2149 = vmatmul.f32.gmra.mxu0 %v1966
      %v2150 = vpop.f32.mrf.mxu0
      %v2151 = vadd.f32 %v1958, %v2150
      %2152 = vmatmul.f32.gmra.mxu0 %v1969
      %v2153 = vpop.f32.mrf.mxu0
      %v2154 = vadd.f32 %v1963, %v2153
      %2155 = vdwg.mxu0
      %2156 = vmatpush.msra.mxu0 0.0
      %2157 = vmatpush.msra.mxu0 0.0
      %2158 = vmatpush.msra.mxu0 0.0
      %2159 = vmatpush.msra.mxu0 0.0
      %2160 = vmatpush.msra.mxu0 0.0
      %2161 = vmatpush.msra.mxu0 0.0
      %2162 = vmatpush.msra.mxu0 0.0
      %2163 = vmatpush.msra.mxu0 0.0
      %2164 = vmatpush.msra.mxu0 0.0
      %2165 = vmatpush.msra.mxu0 0.0
      %2166 = vmatpush.msra.mxu0 0.0
      %2167 = vmatpush.msra.mxu0 0.0
      %2168 = vmatpush.msra.mxu0 0.0
      %2169 = vmatpush.msra.mxu0 0.0
      %2170 = vmatpush.msra.mxu0 0.0
      %2171 = vmatpush.msra.mxu0 %v1993
      %2172 = vmatmul.f32.gmra.mxu0 %v1966
      %v2173 = vpop.f32.mrf.mxu0
      %v2174 = vadd.f32 %v1958, %v2173
      %2175 = vmatmul.f32.gmra.mxu0 %v1969
      %v2176 = vpop.f32.mrf.mxu0
      %v2177 = vadd.f32 %v1963, %v2176
      %2178 = vdwg.mxu0
      %v2179 = vtanh.pop %v2013
      %v2180 = vtanh.pop %v2036
      %v2181 = vtanh.pop %v2059
      %v2182 = vtanh.pop %v2082
      %v2183 = vtanh.pop %v2105
      %v2184 = vtanh.pop %v2128
      %v2185 = vtanh.pop %v2151
      %v2186 = vtanh.pop %v2174
      %v2187 = vtanh.pop %v2016
      %v2188 = vtanh.pop %v2039
      %v2189 = vtanh.pop %v2062
      %v2190 = vtanh.pop %v2085
      %v2191 = vtanh.pop %v2108
      %v2192 = vtanh.pop %v2131
      %v2193 = vtanh.pop %v2154
      %v2194 = vtanh.pop %v2177
      %2195 = vst [vmem:[%s339] sm:$0xff] %v2179
      %2196 = vst [vmem:[%s339 + $0x8] sm:$0xff] %v2180
      %2197 = vst [vmem:[%s339 + $0x10] sm:$0x3f] %v2187
      %2198 = vst [vmem:[%s339 + $0x18] sm:$0x3f] %v2188
      %s2199 = scalar_lea.vmem %s339, 32
      %2200 = vst [vmem:[%s2199] sm:$0xff] %v2181
      %2201 = vst [vmem:[%s2199 + $0x8] sm:$0xff] %v2182
      %2202 = vst [vmem:[%s2199 + $0x10] sm:$0x3f] %v2189
      %2203 = vst [vmem:[%s2199 + $0x18] sm:$0x3f] %v2190
      %s2204 = scalar_lea.vmem %s339, 64
      %2205 = vst [vmem:[%s2204] sm:$0xff] %v2183
      %2206 = vst [vmem:[%s2204 + $0x8] sm:$0xff] %v2184
      %2207 = vst [vmem:[%s2204 + $0x10] sm:$0x3f] %v2191
      %2208 = vst [vmem:[%s2204 + $0x18] sm:$0x3f] %v2192
      %s2209 = scalar_lea.vmem %s339, 96
      %2210 = vst [vmem:[%s2209] sm:$0xff] %v2185
      %2211 = vst [vmem:[%s2209 + $0x8] sm:$0xff] %v2186
      %2212 = vst [vmem:[%s2209 + $0x10] sm:$0x3f] %v2193
      %2213 = vst [vmem:[%s2209 + $0x18] sm:$0x3f] %v2194
      %s2214 = smul.u32 4, %s20
      %p2215 = scmp.lt.s32.totalorder %s2214, 7
      %s2216 = scalar_select %p2215, %s2214, 7
      %s2217 = smul.addr %s2216, 4
      %s2218 = smul.addr %s2217, 8
      %s2219 = scalar_lea.vmem %s9, %s2218
      // Predicated region
      $region57: #{tpu_custom_call.1} parent=55 // pred_check
        %p2220 = pneg %p232
      $region58: #{tpu_custom_call.1} parent=55 // pred_check_branch
        %2222 = sbr.rel (%p2220) target = $region60
      $region59: #{tpu_custom_call.1} parent=55 // pred_region
        %s2223 = smul.u32 4, %s20
      $region60: #{tpu_custom_call.1} parent=55 // pred_fallthru
        _
    $region56: #{tpu_custom_call.1} parent=5 // pred_fallthru
      _
    %p2224 = scmp.le.s32.totalorder 2, %s15
    // Predicated region
    $region61: #{tpu_custom_call.1} parent=5 // pred_check
      %p2225 = pneg %p2224
    $region62: #{tpu_custom_call.1} parent=5 // pred_check_branch
      %2227 = sbr.rel (%p2225) target = $region64
    $region63: #{tpu_custom_call.1} parent=5 // pred_region
      %s2228 = ssub.s32 %s15, 2
      // Predicated region
      $region65: #{tpu_custom_call.1} parent=63 // pred_check
        %p2229 = pneg %p238
      $region66: #{tpu_custom_call.1} parent=63 // pred_check_branch
        %2231 = sbr.rel (%p2229) target = $region68
      $region67: #{tpu_custom_call.1} parent=63 // pred_region
        %s2232 = smul.u32 4, %s21
        %p2233 = scmp.lt.s32.totalorder %s2232, 7
        %s2234 = scalar_select %p2233, %s2232, 7
        %s2235 = smul.addr %s2234, 4
        %s2236 = smul.addr %s2235, 8
        %s2237 = scalar_lea.vmem %s9, %s2236
      $region68: #{tpu_custom_call.1} parent=63 // pred_fallthru
        _
    $region64: #{tpu_custom_call.1} parent=5 // pred_fallthru
      _
  $region6: #{tpu_custom_call.1} parent=0 // loop_footer
    %s19 = sadd.s32 1, %s15
  $region7: #{tpu_custom_call.1} parent=0 // loop_footer_branch
    %14 = sbr.rel target = $region3
  $region8: #{tpu_custom_call.1} parent=0 // loop_exit
    _

</llo_original>
